<compile_context>
chip_gen: v7x
topology: tpu7x:2x2x1
jax: 0.10.0
libtpu: 0.0.40
codegen_flags: <defaults>
</compile_context>

<pallas_src>
import math

import jax
import jax.numpy as jnp
from jax.experimental import pallas as pl
from jax.experimental.pallas import tpu as pltpu


# ----------------------------------------------------------------------------
# Helpers
# ----------------------------------------------------------------------------
def _rup(n, m):
    return ((n + m - 1) // m) * m


def _pad2(a, rows, cols):
    return jnp.pad(a, ((0, rows - a.shape[0]), (0, cols - a.shape[1])))


def _pad_bias(b, cols):
    return jnp.pad(b, (0, cols - b.shape[0])).reshape(1, cols).astype(jnp.float32)


# ----------------------------------------------------------------------------
# Fused kernel: all residual blocks + global time-mean + 3-layer MLP head.
# Gridded over batch tiles; everything else stays resident in VMEM.
# ----------------------------------------------------------------------------
def _build_fused_kernel(block_meta, K, L, PREF, use_skip_connections):
    """block_meta: tuple of (dilation, cin_pad, cout_pad, has_down) per block."""

    def leaky(v):
        return jnp.where(v >= 0.0, v, 0.01 * v)

    def kernel(x_ref, *rest):
        pad_ref = rest[-1]           # VMEM scratch (Bt, PREF+L, C_max_pad)
        out_ref = rest[-2]           # (Bt, 1, OUT_PAD)
        wrefs = rest[:-2]

        bt = x_ref.shape[0]
        c_scr = pad_ref.shape[2]
        cd = pad_ref.dtype           # MXU feed dtype (f32 by default)

        # Zero the causal prefix rows ONCE; conv inputs always land at rows
        # [PREF, PREF+L), so the prefix stays zero for the whole kernel.
        if PREF > 0:
            pad_ref[:, 0:PREF, :] = jnp.zeros((bt, PREF, c_scr), cd)

        def dilated_conv(h2d, w_ref, b_ref, d, cin_p, cout_p):
            # One padded-buffer write per conv (single cast), then K shifted
            # full-lane reads feeding accumulating MXU matmuls.
            pad_ref[:, PREF:PREF + L, 0:cin_p] = (
                h2d.reshape(bt, L, cin_p).astype(cd))
            acc = jnp.zeros((bt * L, cout_p), jnp.float32)
            for k in range(K):
                off = PREF - (K - 1 - k) * d          # >= 0 by construction
                tap = pad_ref[:, off:off + L, 0:cin_p].reshape(bt * L, cin_p)
                acc = acc + jnp.dot(tap, w_ref[k],
                                    preferred_element_type=jnp.float32)
            return acc + b_ref[...].astype(jnp.float32)

        # Activations kept flat (Bt*L, C_pad), f32 elementwise path.
        cin0_p = block_meta[0][1]
        h = x_ref[...].reshape(bt * L, cin0_p).astype(jnp.float32)

        skip_acc = None
        wi = 0
        for (d, cin_p, cout_p, has_down) in block_meta:
            w1, b1, w2, b2 = wrefs[wi:wi + 4]
            wi += 4
            if has_down:
                wd, bd = wrefs[wi], wrefs[wi + 1]
                wi += 2
                # 1x1 downsample conv on the residual path
                res = (jnp.dot(h.astype(cd), wd[...],
                               preferred_element_type=jnp.float32)
                       + bd[...].astype(jnp.float32))
            else:
                res = h
            # conv1 -> ReLU   (dropout = identity at inference)
            h1 = jnp.maximum(dilated_conv(h, w1, b1, d, cin_p, cout_p), 0.0)
            # conv2 -> ReLU -> (+res) -> ReLU
            h2 = jnp.maximum(dilated_conv(h1, w2, b2, d, cout_p, cout_p), 0.0)
            h = jnp.maximum(h2 + res, 0.0)
            if use_skip_connections:
                skip_acc = h if skip_acc is None else skip_acc + h

        if use_skip_connections:
            # TODO(synk): approximation of pytorch-tcn skip aggregation.
            h = jnp.maximum(skip_acc, 0.0)

        # transpose(1,2) + AdaptiveAvgPool1d(1) + squeeze == mean over time.
        c_last_p = block_meta[-1][2]
        pooled = jnp.sum(h.reshape(bt, L, c_last_p), axis=1) * (1.0 / L)

        hw1, hb1, hw2, hb2, hw3, hb3 = wrefs[wi:wi + 6]
        z = leaky(jnp.dot(pooled.astype(cd), hw1[...],
                          preferred_element_type=jnp.float32)
                  + hb1[...].astype(jnp.float32))
        z = leaky(jnp.dot(z.astype(cd), hw2[...],
                          preferred_element_type=jnp.float32)
                  + hb2[...].astype(jnp.float32))
        z = (jnp.dot(z.astype(cd), hw3[...],
                     preferred_element_type=jnp.float32)
             + hb3[...].astype(jnp.float32))
        out_ref[:, 0, :] = z.astype(out_ref.dtype)   # full 128-lane store

    return kernel


# ----------------------------------------------------------------------------
# Forward pass (single pallas_call)
# ----------------------------------------------------------------------------
def regression_tcn_forward(x, params, filter_width, use_skip_connections=False,
                           batch_tile=None, compute_dtype=jnp.float32):
    """x: (B, L, feature_dim) NLC -> (B, output_dim)."""
    B, L, cin0 = x.shape
    K = filter_width
    LANE = 128

    # ---- pad weights to lane-dense (multiples of 128) channel dims ----------
    block_meta = []
    weight_args = []
    cin = cin0
    cin0_p = _rup(cin0, LANE)
    c_max_p = cin0_p
    for i, blk in enumerate(params["blocks"]):
        d = 2 ** i
        cout = blk["w1"].shape[2]
        cin_p, cout_p = _rup(cin, LANE), _rup(cout, LANE)
        has_down = blk["wd"] is not None
        block_meta.append((d, cin_p, cout_p, has_down))
        weight_args += [
            jnp.pad(blk["w1"], ((0, 0), (0, cin_p - cin), (0, cout_p - cout))
                    ).astype(compute_dtype),
            _pad_bias(blk["b1"], cout_p),
            jnp.pad(blk["w2"], ((0, 0), (0, cout_p - cout), (0, cout_p - cout))
                    ).astype(compute_dtype),
            _pad_bias(blk["b2"], cout_p),
        ]
        if has_down:
            weight_args += [
                _pad2(blk["wd"].reshape(cin, cout), cin_p, cout_p
                      ).astype(compute_dtype),
                _pad_bias(blk["bd"], cout_p),
            ]
        c_max_p = max(c_max_p, cin_p, cout_p)
        cin = cout

    c = cin
    c_p = _rup(c, LANE)
    h1_dim = params["w1"].shape[1]
    h1_p = _rup(h1_dim, LANE)
    out_dim = params["w3"].shape[1]
    OUT_PAD = _rup(out_dim, LANE)
    weight_args += [
        _pad2(params["w1"], c_p, h1_p).astype(compute_dtype),
        _pad_bias(params["b1"], h1_p),
        _pad2(params["w2"], h1_p, c_p).astype(compute_dtype),
        _pad_bias(params["b2"], c_p),
        _pad2(params["w3"], c_p, OUT_PAD).astype(compute_dtype),
        _pad_bias(params["b3"], OUT_PAD),
    ]

    # ---- causal-prefix size (rounded to 8 so the per-conv write is aligned) --
    p_max = (K - 1) * (2 ** (len(params["blocks"]) - 1))
    PREF = _rup(p_max, 8) if p_max > 0 else 0

    # ---- batch tiling: grid=1 by default (single-TC chips); v7x callers can
    #      pass batch_tile=B//2 for two "parallel" grid steps -----------------
    if batch_tile is None:
        try:
            num_cores = int(getattr(jax.devices()[0], "num_cores", 1) or 1)
        except Exception:
            num_cores = 1
        if num_cores > 1 and B % num_cores == 0:
            batch_tile = B // num_cores
        else:
            batch_tile = B
    assert B % batch_tile == 0, (B, batch_tile)
    grid = (B // batch_tile,)

    # ---- pad x channels to lane width ---------------------------------------
    x_p = jnp.pad(x, ((0, 0), (0, 0), (0, cin0_p - cin0)))

    # ---- VMEM budget from the real footprint --------------------------------
    cd_bytes = jnp.dtype(compute_dtype).itemsize
    weight_bytes = sum(int(a.size) * a.dtype.itemsize for a in weight_args)
    act_bytes = batch_tile * L * c_max_p * 4
    footprint = (
        2 * batch_tile * L * cin0_p * x_p.dtype.itemsize       # x, dbl-buffered
        + batch_tile * (PREF + L) * c_max_p * cd_bytes          # pad scratch
        + 2 * weight_bytes                                      # weights
        + 2 * batch_tile * OUT_PAD * 4                          # out block
        + 8 * act_bytes                                         # live h/h1/h2/res/acc
    )
    try:
        vmem_cap = int(pltpu.get_tpu_info().vmem_capacity_bytes)
    except Exception:
        vmem_cap = 64 << 20                                     # v7x-safe default
    vmem_limit = int(min(max(footprint + (2 << 20), 16 << 20),
                         vmem_cap - (2 << 20)))

    kernel = _build_fused_kernel(tuple(block_meta), K, L, PREF,
                                 use_skip_connections)

    in_specs = [pl.BlockSpec((batch_tile, L, cin0_p), lambda i: (i, 0, 0))]
    for a in weight_args:
        in_specs.append(pl.BlockSpec(a.shape, lambda i, _nd=a.ndim: (0,) * _nd))

    out = pl.pallas_call(
        kernel,
        out_shape=jax.ShapeDtypeStruct((B, 1, OUT_PAD), x.dtype),
        grid=grid,
        in_specs=in_specs,
        out_specs=pl.BlockSpec((batch_tile, 1, OUT_PAD), lambda i: (i, 0, 0)),
        scratch_shapes=[pltpu.VMEM((batch_tile, PREF + L, c_max_p),
                                   compute_dtype)],
        compiler_params=pltpu.CompilerParams(
            dimension_semantics=("parallel",),
            vmem_limit_bytes=vmem_limit),
    )(x_p, *weight_args)
    return out.reshape(B, OUT_PAD)[:, :out_dim]


# ----------------------------------------------------------------------------
# Parameter init (deterministic, synthetic)
# ----------------------------------------------------------------------------
def _xavier_uniform(key, shape, fan_in, fan_out):
    limit = math.sqrt(6.0 / (fan_in + fan_out))
    return jax.random.uniform(key, shape, jnp.float32, -limit, limit)


def _linear_init(key, fan_in, fan_out):
    kw, kb = jax.random.split(key)
    bound = 1.0 / math.sqrt(fan_in)
    w = jax.random.uniform(kw, (fan_in, fan_out), jnp.float32, -bound, bound)
    b = jax.random.uniform(kb, (fan_out,), jnp.float32, -bound, bound)
    return w, b


def init_params(key, feature_dim, output_dim, hidden_channels, filter_width):
    K = filter_width
    params = {"blocks": []}
    cin = feature_dim
    for cout in hidden_channels:
        key, k1, k2, k3 = jax.random.split(key, 4)
        blk = {
            "w1": _xavier_uniform(k1, (K, cin, cout), cin * K, cout * K),
            "b1": jnp.zeros((cout,), jnp.float32),
            "w2": _xavier_uniform(k2, (K, cout, cout), cout * K, cout * K),
            "b2": jnp.zeros((cout,), jnp.float32),
            "wd": None,
            "bd": None,
        }
        if cin != cout:  # 1x1 downsample conv on residual path
            blk["wd"] = _xavier_uniform(k3, (1, cin, cout), cin, cout)
            blk["bd"] = jnp.zeros((cout,), jnp.float32)
        params["blocks"].append(blk)
        cin = cout

    c = hidden_channels[-1]
    key, k1, k2, k3 = jax.random.split(key, 4)
    params["w1"], params["b1"] = _linear_init(k1, c, 2 * c)
    params["w2"], params["b2"] = _linear_init(k2, 2 * c, c)
    params["w3"], params["b3"] = _linear_init(k3, c, output_dim)
    return params


# ----------------------------------------------------------------------------
# Pure-JAX reference (for a correctness check in __main__)
# ----------------------------------------------------------------------------
def _reference_forward(x, params, filter_width, use_skip_connections=False):
    def conv(h, w, b, d):
        Kw = w.shape[0]
        L = h.shape[1]
        xp = jnp.pad(h, ((0, 0), ((Kw - 1) * d, 0), (0, 0)))
        y = sum(jnp.einsum('blc,co->blo', xp[:, k * d:k * d + L, :], w[k])
                for k in range(Kw))
        return y + b

    h = x
    skips = []
    for i, blk in enumerate(params["blocks"]):
        d = 2 ** i
        h1 = jax.nn.relu(conv(h, blk["w1"], blk["b1"], d))
        res = conv(h, blk["wd"], blk["bd"], 1) if blk["wd"] is not None else h
        h2 = jax.nn.relu(conv(h1, blk["w2"], blk["b2"], d))
        h = jax.nn.relu(h2 + res)
        skips.append(h)
    if use_skip_connections:
        h = jax.nn.relu(sum(skips))
    pooled = jnp.mean(h, axis=1)
    z = jax.nn.leaky_relu(pooled @ params["w1"] + params["b1"], 0.01)
    z = jax.nn.leaky_relu(z @ params["w2"] + params["b2"], 0.01)
    return z @ params["w3"] + params["b3"]


if __name__ == "__main__":
    B, L = 2, 16
    feature_dim = 4
    hidden_channels = [8, 8]
    filter_width = 3
    output_dim = 3

    key = jax.random.PRNGKey(0)
    kx, kp = jax.random.split(key)
    x = jax.random.normal(kx, (B, L, feature_dim), jnp.float32)
    params = init_params(kp, feature_dim, output_dim, hidden_channels,
                         filter_width)

    y = regression_tcn_forward(x, params, filter_width,
                               use_skip_connections=False)
    y = jax.block_until_ready(y)
    assert y.shape == (B, output_dim), y.shape

    y_ref = _reference_forward(x, params, filter_width,
                               use_skip_connections=False)
    assert jnp.allclose(y, y_ref, atol=1e-4, rtol=1e-4), (y, y_ref)

    print("KERNEL_OK")
</pallas_src>

<mosaic_0001>
module attributes {stable_mosaic.version = 11 : i64} {
  func.func @kernel(%arg0: i32, %arg1: memref<2x16x128xf32, #tpu.memory_space<vmem>>, %arg2: memref<3x128x128xf32, #tpu.memory_space<vmem>>, %arg3: memref<1x128xf32, #tpu.memory_space<vmem>>, %arg4: memref<3x128x128xf32, #tpu.memory_space<vmem>>, %arg5: memref<1x128xf32, #tpu.memory_space<vmem>>, %arg6: memref<128x128xf32, #tpu.memory_space<vmem>>, %arg7: memref<1x128xf32, #tpu.memory_space<vmem>>, %arg8: memref<3x128x128xf32, #tpu.memory_space<vmem>>, %arg9: memref<1x128xf32, #tpu.memory_space<vmem>>, %arg10: memref<3x128x128xf32, #tpu.memory_space<vmem>>, %arg11: memref<1x128xf32, #tpu.memory_space<vmem>>, %arg12: memref<128x128xf32, #tpu.memory_space<vmem>>, %arg13: memref<1x128xf32, #tpu.memory_space<vmem>>, %arg14: memref<128x128xf32, #tpu.memory_space<vmem>>, %arg15: memref<1x128xf32, #tpu.memory_space<vmem>>, %arg16: memref<128x128xf32, #tpu.memory_space<vmem>>, %arg17: memref<1x128xf32, #tpu.memory_space<vmem>>, %arg18: memref<2x1x128xf32, #tpu.memory_space<vmem>>, %arg19: memref<2x24x128xf32, #tpu.memory_space<vmem>>) attributes {dimension_semantics = [#tpu.dimension_semantics<parallel>], iteration_bounds = array<i64: 1>, scalar_prefetch = 0 : i64, scratch_operands = 1 : i64, tpu.core_type = #tpu.core_type<tc>, window_params = [{transform_indices = @transform_0, window_bounds = array<i64: 2, 16, 128>}, {pipeline_mode = #tpu.pipeline_mode<synchronous>, transform_indices = @transform_1, window_bounds = array<i64: 3, 128, 128>}, {pipeline_mode = #tpu.pipeline_mode<synchronous>, transform_indices = @transform_2, window_bounds = array<i64: 1, 128>}, {pipeline_mode = #tpu.pipeline_mode<synchronous>, transform_indices = @transform_3, window_bounds = array<i64: 3, 128, 128>}, {pipeline_mode = #tpu.pipeline_mode<synchronous>, transform_indices = @transform_4, window_bounds = array<i64: 1, 128>}, {pipeline_mode = #tpu.pipeline_mode<synchronous>, transform_indices = @transform_5, window_bounds = array<i64: 128, 128>}, {pipeline_mode = #tpu.pipeline_mode<synchronous>, transform_indices = @transform_6, window_bounds = array<i64: 1, 128>}, {pipeline_mode = #tpu.pipeline_mode<synchronous>, transform_indices = @transform_7, window_bounds = array<i64: 3, 128, 128>}, {pipeline_mode = #tpu.pipeline_mode<synchronous>, transform_indices = @transform_8, window_bounds = array<i64: 1, 128>}, {pipeline_mode = #tpu.pipeline_mode<synchronous>, transform_indices = @transform_9, window_bounds = array<i64: 3, 128, 128>}, {pipeline_mode = #tpu.pipeline_mode<synchronous>, transform_indices = @transform_10, window_bounds = array<i64: 1, 128>}, {pipeline_mode = #tpu.pipeline_mode<synchronous>, transform_indices = @transform_11, window_bounds = array<i64: 128, 128>}, {pipeline_mode = #tpu.pipeline_mode<synchronous>, transform_indices = @transform_12, window_bounds = array<i64: 1, 128>}, {pipeline_mode = #tpu.pipeline_mode<synchronous>, transform_indices = @transform_13, window_bounds = array<i64: 128, 128>}, {pipeline_mode = #tpu.pipeline_mode<synchronous>, transform_indices = @transform_14, window_bounds = array<i64: 1, 128>}, {pipeline_mode = #tpu.pipeline_mode<synchronous>, transform_indices = @transform_15, window_bounds = array<i64: 128, 128>}, {pipeline_mode = #tpu.pipeline_mode<synchronous>, transform_indices = @transform_16, window_bounds = array<i64: 1, 128>}, {transform_indices = @transform_17, window_bounds = array<i64: 2, 1, 128>}]} {
    %cst = arith.constant 0.000000e+00 : f32
    %0 = vector.broadcast %cst : f32 to vector<2x8x128xf32>
    %c0 = arith.constant 0 : index
    %c0_0 = arith.constant 0 : index
    %c0_1 = arith.constant 0 : index
    %1 = vector.load %arg19[%c0, %c0_0, %c0_1] : memref<2x24x128xf32, #tpu.memory_space<vmem>>, vector<2x8x128xf32>
    tpu.vector_store %arg19[%c0, %c0_0, %c0_1], %0 {strides = array<i32>} : memref<2x24x128xf32, #tpu.memory_space<vmem>>, vector<2x8x128xf32>,
    %c0_2 = arith.constant 0 : index
    %c0_3 = arith.constant 0 : index
    %c0_4 = arith.constant 0 : index
    %2 = vector.load %arg1[%c0_2, %c0_3, %c0_4] : memref<2x16x128xf32, #tpu.memory_space<vmem>>, vector<2x16x128xf32>
    %3 = vector.shape_cast %2 : vector<2x16x128xf32> to vector<32x128xf32>
    %c0_5 = arith.constant 0 : index
    %c0_6 = arith.constant 0 : index
    %4 = vector.load %arg6[%c0_5, %c0_6] : memref<128x128xf32, #tpu.memory_space<vmem>>, vector<128x128xf32>
    %cst_7 = arith.constant dense<0.000000e+00> : vector<32x128xf32>
    %5 = tpu.matmul %3, %4, %cst_7 {dimension_numbers = #tpu.dot_dimension_numbers<[1], [0], [0], [1], [0, 0, 1, 1], [], []>} : vector<32x128xf32>, vector<128x128xf32>, vector<32x128xf32> -> vector<32x128xf32>
    %c0_8 = arith.constant 0 : index
    %c0_9 = arith.constant 0 : index
    %6 = vector.load %arg7[%c0_8, %c0_9] : memref<1x128xf32, #tpu.memory_space<vmem>>, vector<1x128xf32>
    %7 = vector.broadcast %6 : vector<1x128xf32> to vector<32x128xf32>
    %8 = arith.addf %5, %7 : vector<32x128xf32>
    %9 = vector.shape_cast %3 : vector<32x128xf32> to vector<2x16x128xf32>
    %c0_10 = arith.constant 0 : index
    %c8 = arith.constant 8 : index
    %c0_11 = arith.constant 0 : index
    %10 = vector.load %arg19[%c0_10, %c8, %c0_11] : memref<2x24x128xf32, #tpu.memory_space<vmem>>, vector<2x16x128xf32>
    tpu.vector_store %arg19[%c0_10, %c8, %c0_11], %9 {strides = array<i32>} : memref<2x24x128xf32, #tpu.memory_space<vmem>>, vector<2x16x128xf32>,
    %cst_12 = arith.constant 0.000000e+00 : f32
    %11 = vector.broadcast %cst_12 : f32 to vector<32x128xf32>
    %c0_13 = arith.constant 0 : index
    %c6 = arith.constant 6 : index
    %c0_14 = arith.constant 0 : index
    %12 = vector.load %arg19[%c0_13, %c6, %c0_14] : memref<2x24x128xf32, #tpu.memory_space<vmem>>, vector<2x16x128xf32>
    %13 = vector.shape_cast %12 : vector<2x16x128xf32> to vector<32x128xf32>
    %c0_15 = arith.constant 0 : index
    %c0_16 = arith.constant 0 : index
    %c0_17 = arith.constant 0 : index
    %14 = vector.load %arg2[%c0_15, %c0_16, %c0_17] : memref<3x128x128xf32, #tpu.memory_space<vmem>>, vector<1x128x128xf32>
    %15 = vector.shape_cast %14 : vector<1x128x128xf32> to vector<128x128xf32>
    %cst_18 = arith.constant dense<0.000000e+00> : vector<32x128xf32>
    %16 = tpu.matmul %13, %15, %cst_18 {dimension_numbers = #tpu.dot_dimension_numbers<[1], [0], [0], [1], [0, 0, 1, 1], [], []>} : vector<32x128xf32>, vector<128x128xf32>, vector<32x128xf32> -> vector<32x128xf32>
    %17 = arith.addf %11, %16 : vector<32x128xf32>
    %c0_19 = arith.constant 0 : index
    %c7 = arith.constant 7 : index
    %c0_20 = arith.constant 0 : index
    %18 = vector.load %arg19[%c0_19, %c7, %c0_20] : memref<2x24x128xf32, #tpu.memory_space<vmem>>, vector<2x16x128xf32>
    %19 = vector.shape_cast %18 : vector<2x16x128xf32> to vector<32x128xf32>
    %c1 = arith.constant 1 : index
    %c0_21 = arith.constant 0 : index
    %c0_22 = arith.constant 0 : index
    %20 = vector.load %arg2[%c1, %c0_21, %c0_22] : memref<3x128x128xf32, #tpu.memory_space<vmem>>, vector<1x128x128xf32>
    %21 = vector.shape_cast %20 : vector<1x128x128xf32> to vector<128x128xf32>
    %cst_23 = arith.constant dense<0.000000e+00> : vector<32x128xf32>
    %22 = tpu.matmul %19, %21, %cst_23 {dimension_numbers = #tpu.dot_dimension_numbers<[1], [0], [0], [1], [0, 0, 1, 1], [], []>} : vector<32x128xf32>, vector<128x128xf32>, vector<32x128xf32> -> vector<32x128xf32>
    %23 = arith.addf %17, %22 : vector<32x128xf32>
    %c0_24 = arith.constant 0 : index
    %c8_25 = arith.constant 8 : index
    %c0_26 = arith.constant 0 : index
    %24 = vector.load %arg19[%c0_24, %c8_25, %c0_26] : memref<2x24x128xf32, #tpu.memory_space<vmem>>, vector<2x16x128xf32>
    %25 = vector.shape_cast %24 : vector<2x16x128xf32> to vector<32x128xf32>
    %c2 = arith.constant 2 : index
    %c0_27 = arith.constant 0 : index
    %c0_28 = arith.constant 0 : index
    %26 = vector.load %arg2[%c2, %c0_27, %c0_28] : memref<3x128x128xf32, #tpu.memory_space<vmem>>, vector<1x128x128xf32>
    %27 = vector.shape_cast %26 : vector<1x128x128xf32> to vector<128x128xf32>
    %cst_29 = arith.constant dense<0.000000e+00> : vector<32x128xf32>
    %28 = tpu.matmul %25, %27, %cst_29 {dimension_numbers = #tpu.dot_dimension_numbers<[1], [0], [0], [1], [0, 0, 1, 1], [], []>} : vector<32x128xf32>, vector<128x128xf32>, vector<32x128xf32> -> vector<32x128xf32>
    %29 = arith.addf %23, %28 : vector<32x128xf32>
    %c0_30 = arith.constant 0 : index
    %c0_31 = arith.constant 0 : index
    %30 = vector.load %arg3[%c0_30, %c0_31] : memref<1x128xf32, #tpu.memory_space<vmem>>, vector<1x128xf32>
    %31 = vector.broadcast %30 : vector<1x128xf32> to vector<32x128xf32>
    %32 = arith.addf %29, %31 : vector<32x128xf32>
    %cst_32 = arith.constant 0.000000e+00 : f32
    %33 = vector.broadcast %cst_32 : f32 to vector<32x128xf32>
    %34 = arith.maximumf %32, %33 : vector<32x128xf32>
    %35 = vector.shape_cast %34 : vector<32x128xf32> to vector<2x16x128xf32>
    %c0_33 = arith.constant 0 : index
    %c8_34 = arith.constant 8 : index
    %c0_35 = arith.constant 0 : index
    %36 = vector.load %arg19[%c0_33, %c8_34, %c0_35] : memref<2x24x128xf32, #tpu.memory_space<vmem>>, vector<2x16x128xf32>
    tpu.vector_store %arg19[%c0_33, %c8_34, %c0_35], %35 {strides = array<i32>} : memref<2x24x128xf32, #tpu.memory_space<vmem>>, vector<2x16x128xf32>,
    %cst_36 = arith.constant 0.000000e+00 : f32
    %37 = vector.broadcast %cst_36 : f32 to vector<32x128xf32>
    %c0_37 = arith.constant 0 : index
    %c6_38 = arith.constant 6 : index
    %c0_39 = arith.constant 0 : index
    %38 = vector.load %arg19[%c0_37, %c6_38, %c0_39] : memref<2x24x128xf32, #tpu.memory_space<vmem>>, vector<2x16x128xf32>
    %39 = vector.shape_cast %38 : vector<2x16x128xf32> to vector<32x128xf32>
    %c0_40 = arith.constant 0 : index
    %c0_41 = arith.constant 0 : index
    %c0_42 = arith.constant 0 : index
    %40 = vector.load %arg4[%c0_40, %c0_41, %c0_42] : memref<3x128x128xf32, #tpu.memory_space<vmem>>, vector<1x128x128xf32>
    %41 = vector.shape_cast %40 : vector<1x128x128xf32> to vector<128x128xf32>
    %cst_43 = arith.constant dense<0.000000e+00> : vector<32x128xf32>
    %42 = tpu.matmul %39, %41, %cst_43 {dimension_numbers = #tpu.dot_dimension_numbers<[1], [0], [0], [1], [0, 0, 1, 1], [], []>} : vector<32x128xf32>, vector<128x128xf32>, vector<32x128xf32> -> vector<32x128xf32>
    %43 = arith.addf %37, %42 : vector<32x128xf32>
    %c0_44 = arith.constant 0 : index
    %c7_45 = arith.constant 7 : index
    %c0_46 = arith.constant 0 : index
    %44 = vector.load %arg19[%c0_44, %c7_45, %c0_46] : memref<2x24x128xf32, #tpu.memory_space<vmem>>, vector<2x16x128xf32>
    %45 = vector.shape_cast %44 : vector<2x16x128xf32> to vector<32x128xf32>
    %c1_47 = arith.constant 1 : index
    %c0_48 = arith.constant 0 : index
    %c0_49 = arith.constant 0 : index
    %46 = vector.load %arg4[%c1_47, %c0_48, %c0_49] : memref<3x128x128xf32, #tpu.memory_space<vmem>>, vector<1x128x128xf32>
    %47 = vector.shape_cast %46 : vector<1x128x128xf32> to vector<128x128xf32>
    %cst_50 = arith.constant dense<0.000000e+00> : vector<32x128xf32>
    %48 = tpu.matmul %45, %47, %cst_50 {dimension_numbers = #tpu.dot_dimension_numbers<[1], [0], [0], [1], [0, 0, 1, 1], [], []>} : vector<32x128xf32>, vector<128x128xf32>, vector<32x128xf32> -> vector<32x128xf32>
    %49 = arith.addf %43, %48 : vector<32x128xf32>
    %c0_51 = arith.constant 0 : index
    %c8_52 = arith.constant 8 : index
    %c0_53 = arith.constant 0 : index
    %50 = vector.load %arg19[%c0_51, %c8_52, %c0_53] : memref<2x24x128xf32, #tpu.memory_space<vmem>>, vector<2x16x128xf32>
    %51 = vector.shape_cast %50 : vector<2x16x128xf32> to vector<32x128xf32>
    %c2_54 = arith.constant 2 : index
    %c0_55 = arith.constant 0 : index
    %c0_56 = arith.constant 0 : index
    %52 = vector.load %arg4[%c2_54, %c0_55, %c0_56] : memref<3x128x128xf32, #tpu.memory_space<vmem>>, vector<1x128x128xf32>
    %53 = vector.shape_cast %52 : vector<1x128x128xf32> to vector<128x128xf32>
    %cst_57 = arith.constant dense<0.000000e+00> : vector<32x128xf32>
    %54 = tpu.matmul %51, %53, %cst_57 {dimension_numbers = #tpu.dot_dimension_numbers<[1], [0], [0], [1], [0, 0, 1, 1], [], []>} : vector<32x128xf32>, vector<128x128xf32>, vector<32x128xf32> -> vector<32x128xf32>
    %55 = arith.addf %49, %54 : vector<32x128xf32>
    %c0_58 = arith.constant 0 : index
    %c0_59 = arith.constant 0 : index
    %56 = vector.load %arg5[%c0_58, %c0_59] : memref<1x128xf32, #tpu.memory_space<vmem>>, vector<1x128xf32>
    %57 = vector.broadcast %56 : vector<1x128xf32> to vector<32x128xf32>
    %58 = arith.addf %55, %57 : vector<32x128xf32>
    %cst_60 = arith.constant 0.000000e+00 : f32
    %59 = vector.broadcast %cst_60 : f32 to vector<32x128xf32>
    %60 = arith.maximumf %58, %59 : vector<32x128xf32>
    %61 = arith.addf %60, %8 : vector<32x128xf32>
    %cst_61 = arith.constant 0.000000e+00 : f32
    %62 = vector.broadcast %cst_61 : f32 to vector<32x128xf32>
    %63 = arith.maximumf %61, %62 : vector<32x128xf32>
    %64 = vector.shape_cast %63 : vector<32x128xf32> to vector<2x16x128xf32>
    %c0_62 = arith.constant 0 : index
    %c8_63 = arith.constant 8 : index
    %c0_64 = arith.constant 0 : index
    %65 = vector.load %arg19[%c0_62, %c8_63, %c0_64] : memref<2x24x128xf32, #tpu.memory_space<vmem>>, vector<2x16x128xf32>
    tpu.vector_store %arg19[%c0_62, %c8_63, %c0_64], %64 {strides = array<i32>} : memref<2x24x128xf32, #tpu.memory_space<vmem>>, vector<2x16x128xf32>,
    %cst_65 = arith.constant 0.000000e+00 : f32
    %66 = vector.broadcast %cst_65 : f32 to vector<32x128xf32>
    %c0_66 = arith.constant 0 : index
    %c4 = arith.constant 4 : index
    %c0_67 = arith.constant 0 : index
    %67 = vector.load %arg19[%c0_66, %c4, %c0_67] : memref<2x24x128xf32, #tpu.memory_space<vmem>>, vector<2x16x128xf32>
    %68 = vector.shape_cast %67 : vector<2x16x128xf32> to vector<32x128xf32>
    %c0_68 = arith.constant 0 : index
    %c0_69 = arith.constant 0 : index
    %c0_70 = arith.constant 0 : index
    %69 = vector.load %arg8[%c0_68, %c0_69, %c0_70] : memref<3x128x128xf32, #tpu.memory_space<vmem>>, vector<1x128x128xf32>
    %70 = vector.shape_cast %69 : vector<1x128x128xf32> to vector<128x128xf32>
    %cst_71 = arith.constant dense<0.000000e+00> : vector<32x128xf32>
    %71 = tpu.matmul %68, %70, %cst_71 {dimension_numbers = #tpu.dot_dimension_numbers<[1], [0], [0], [1], [0, 0, 1, 1], [], []>} : vector<32x128xf32>, vector<128x128xf32>, vector<32x128xf32> -> vector<32x128xf32>
    %72 = arith.addf %66, %71 : vector<32x128xf32>
    %c0_72 = arith.constant 0 : index
    %c6_73 = arith.constant 6 : index
    %c0_74 = arith.constant 0 : index
    %73 = vector.load %arg19[%c0_72, %c6_73, %c0_74] : memref<2x24x128xf32, #tpu.memory_space<vmem>>, vector<2x16x128xf32>
    %74 = vector.shape_cast %73 : vector<2x16x128xf32> to vector<32x128xf32>
    %c1_75 = arith.constant 1 : index
    %c0_76 = arith.constant 0 : index
    %c0_77 = arith.constant 0 : index
    %75 = vector.load %arg8[%c1_75, %c0_76, %c0_77] : memref<3x128x128xf32, #tpu.memory_space<vmem>>, vector<1x128x128xf32>
    %76 = vector.shape_cast %75 : vector<1x128x128xf32> to vector<128x128xf32>
    %cst_78 = arith.constant dense<0.000000e+00> : vector<32x128xf32>
    %77 = tpu.matmul %74, %76, %cst_78 {dimension_numbers = #tpu.dot_dimension_numbers<[1], [0], [0], [1], [0, 0, 1, 1], [], []>} : vector<32x128xf32>, vector<128x128xf32>, vector<32x128xf32> -> vector<32x128xf32>
    %78 = arith.addf %72, %77 : vector<32x128xf32>
    %c0_79 = arith.constant 0 : index
    %c8_80 = arith.constant 8 : index
    %c0_81 = arith.constant 0 : index
    %79 = vector.load %arg19[%c0_79, %c8_80, %c0_81] : memref<2x24x128xf32, #tpu.memory_space<vmem>>, vector<2x16x128xf32>
    %80 = vector.shape_cast %79 : vector<2x16x128xf32> to vector<32x128xf32>
    %c2_82 = arith.constant 2 : index
    %c0_83 = arith.constant 0 : index
    %c0_84 = arith.constant 0 : index
    %81 = vector.load %arg8[%c2_82, %c0_83, %c0_84] : memref<3x128x128xf32, #tpu.memory_space<vmem>>, vector<1x128x128xf32>
    %82 = vector.shape_cast %81 : vector<1x128x128xf32> to vector<128x128xf32>
    %cst_85 = arith.constant dense<0.000000e+00> : vector<32x128xf32>
    %83 = tpu.matmul %80, %82, %cst_85 {dimension_numbers = #tpu.dot_dimension_numbers<[1], [0], [0], [1], [0, 0, 1, 1], [], []>} : vector<32x128xf32>, vector<128x128xf32>, vector<32x128xf32> -> vector<32x128xf32>
    %84 = arith.addf %78, %83 : vector<32x128xf32>
    %c0_86 = arith.constant 0 : index
    %c0_87 = arith.constant 0 : index
    %85 = vector.load %arg9[%c0_86, %c0_87] : memref<1x128xf32, #tpu.memory_space<vmem>>, vector<1x128xf32>
    %86 = vector.broadcast %85 : vector<1x128xf32> to vector<32x128xf32>
    %87 = arith.addf %84, %86 : vector<32x128xf32>
    %cst_88 = arith.constant 0.000000e+00 : f32
    %88 = vector.broadcast %cst_88 : f32 to vector<32x128xf32>
    %89 = arith.maximumf %87, %88 : vector<32x128xf32>
    %90 = vector.shape_cast %89 : vector<32x128xf32> to vector<2x16x128xf32>
    %c0_89 = arith.constant 0 : index
    %c8_90 = arith.constant 8 : index
    %c0_91 = arith.constant 0 : index
    %91 = vector.load %arg19[%c0_89, %c8_90, %c0_91] : memref<2x24x128xf32, #tpu.memory_space<vmem>>, vector<2x16x128xf32>
    tpu.vector_store %arg19[%c0_89, %c8_90, %c0_91], %90 {strides = array<i32>} : memref<2x24x128xf32, #tpu.memory_space<vmem>>, vector<2x16x128xf32>,
    %cst_92 = arith.constant 0.000000e+00 : f32
    %92 = vector.broadcast %cst_92 : f32 to vector<32x128xf32>
    %c0_93 = arith.constant 0 : index
    %c4_94 = arith.constant 4 : index
    %c0_95 = arith.constant 0 : index
    %93 = vector.load %arg19[%c0_93, %c4_94, %c0_95] : memref<2x24x128xf32, #tpu.memory_space<vmem>>, vector<2x16x128xf32>
    %94 = vector.shape_cast %93 : vector<2x16x128xf32> to vector<32x128xf32>
    %c0_96 = arith.constant 0 : index
    %c0_97 = arith.constant 0 : index
    %c0_98 = arith.constant 0 : index
    %95 = vector.load %arg10[%c0_96, %c0_97, %c0_98] : memref<3x128x128xf32, #tpu.memory_space<vmem>>, vector<1x128x128xf32>
    %96 = vector.shape_cast %95 : vector<1x128x128xf32> to vector<128x128xf32>
    %cst_99 = arith.constant dense<0.000000e+00> : vector<32x128xf32>
    %97 = tpu.matmul %94, %96, %cst_99 {dimension_numbers = #tpu.dot_dimension_numbers<[1], [0], [0], [1], [0, 0, 1, 1], [], []>} : vector<32x128xf32>, vector<128x128xf32>, vector<32x128xf32> -> vector<32x128xf32>
    %98 = arith.addf %92, %97 : vector<32x128xf32>
    %c0_100 = arith.constant 0 : index
    %c6_101 = arith.constant 6 : index
    %c0_102 = arith.constant 0 : index
    %99 = vector.load %arg19[%c0_100, %c6_101, %c0_102] : memref<2x24x128xf32, #tpu.memory_space<vmem>>, vector<2x16x128xf32>
    %100 = vector.shape_cast %99 : vector<2x16x128xf32> to vector<32x128xf32>
    %c1_103 = arith.constant 1 : index
    %c0_104 = arith.constant 0 : index
    %c0_105 = arith.constant 0 : index
    %101 = vector.load %arg10[%c1_103, %c0_104, %c0_105] : memref<3x128x128xf32, #tpu.memory_space<vmem>>, vector<1x128x128xf32>
    %102 = vector.shape_cast %101 : vector<1x128x128xf32> to vector<128x128xf32>
    %cst_106 = arith.constant dense<0.000000e+00> : vector<32x128xf32>
    %103 = tpu.matmul %100, %102, %cst_106 {dimension_numbers = #tpu.dot_dimension_numbers<[1], [0], [0], [1], [0, 0, 1, 1], [], []>} : vector<32x128xf32>, vector<128x128xf32>, vector<32x128xf32> -> vector<32x128xf32>
    %104 = arith.addf %98, %103 : vector<32x128xf32>
    %c0_107 = arith.constant 0 : index
    %c8_108 = arith.constant 8 : index
    %c0_109 = arith.constant 0 : index
    %105 = vector.load %arg19[%c0_107, %c8_108, %c0_109] : memref<2x24x128xf32, #tpu.memory_space<vmem>>, vector<2x16x128xf32>
    %106 = vector.shape_cast %105 : vector<2x16x128xf32> to vector<32x128xf32>
    %c2_110 = arith.constant 2 : index
    %c0_111 = arith.constant 0 : index
    %c0_112 = arith.constant 0 : index
    %107 = vector.load %arg10[%c2_110, %c0_111, %c0_112] : memref<3x128x128xf32, #tpu.memory_space<vmem>>, vector<1x128x128xf32>
    %108 = vector.shape_cast %107 : vector<1x128x128xf32> to vector<128x128xf32>
    %cst_113 = arith.constant dense<0.000000e+00> : vector<32x128xf32>
    %109 = tpu.matmul %106, %108, %cst_113 {dimension_numbers = #tpu.dot_dimension_numbers<[1], [0], [0], [1], [0, 0, 1, 1], [], []>} : vector<32x128xf32>, vector<128x128xf32>, vector<32x128xf32> -> vector<32x128xf32>
    %110 = arith.addf %104, %109 : vector<32x128xf32>
    %c0_114 = arith.constant 0 : index
    %c0_115 = arith.constant 0 : index
    %111 = vector.load %arg11[%c0_114, %c0_115] : memref<1x128xf32, #tpu.memory_space<vmem>>, vector<1x128xf32>
    %112 = vector.broadcast %111 : vector<1x128xf32> to vector<32x128xf32>
    %113 = arith.addf %110, %112 : vector<32x128xf32>
    %cst_116 = arith.constant 0.000000e+00 : f32
    %114 = vector.broadcast %cst_116 : f32 to vector<32x128xf32>
    %115 = arith.maximumf %113, %114 : vector<32x128xf32>
    %116 = arith.addf %115, %63 : vector<32x128xf32>
    %cst_117 = arith.constant 0.000000e+00 : f32
    %117 = vector.broadcast %cst_117 : f32 to vector<32x128xf32>
    %118 = arith.maximumf %116, %117 : vector<32x128xf32>
    %119 = vector.shape_cast %118 : vector<32x128xf32> to vector<2x16x128xf32>
    %cst_118 = arith.constant dense<0.000000e+00> : vector<2x128xf32>
    %120 = vector.multi_reduction <add>, %119, %cst_118 [1] : vector<2x16x128xf32> to vector<2x128xf32>
    %cst_119 = arith.constant 6.250000e-02 : f32
    %121 = vector.broadcast %cst_119 : f32 to vector<2x128xf32>
    %122 = arith.mulf %120, %121 : vector<2x128xf32>
    %c0_120 = arith.constant 0 : index
    %c0_121 = arith.constant 0 : index
    %123 = vector.load %arg12[%c0_120, %c0_121] : memref<128x128xf32, #tpu.memory_space<vmem>>, vector<128x128xf32>
    %cst_122 = arith.constant dense<0.000000e+00> : vector<2x128xf32>
    %124 = tpu.matmul %122, %123, %cst_122 {dimension_numbers = #tpu.dot_dimension_numbers<[1], [0], [0], [1], [0, 0, 1, 1], [], []>} : vector<2x128xf32>, vector<128x128xf32>, vector<2x128xf32> -> vector<2x128xf32>
    %c0_123 = arith.constant 0 : index
    %c0_124 = arith.constant 0 : index
    %125 = vector.load %arg13[%c0_123, %c0_124] : memref<1x128xf32, #tpu.memory_space<vmem>>, vector<1x128xf32>
    %126 = vector.broadcast %125 : vector<1x128xf32> to vector<2x128xf32>
    %127 = arith.addf %124, %126 : vector<2x128xf32>
    %cst_125 = arith.constant 0.000000e+00 : f32
    %128 = vector.broadcast %cst_125 : f32 to vector<2x128xf32>
    %129 = arith.cmpf oge, %127, %128 : vector<2x128xf32>
    %cst_126 = arith.constant 0.00999999977 : f32
    %130 = vector.broadcast %cst_126 : f32 to vector<2x128xf32>
    %131 = arith.mulf %130, %127 : vector<2x128xf32>
    %132 = arith.select %129, %127, %131 : vector<2x128xi1>, vector<2x128xf32>
    %c0_127 = arith.constant 0 : index
    %c0_128 = arith.constant 0 : index
    %133 = vector.load %arg14[%c0_127, %c0_128] : memref<128x128xf32, #tpu.memory_space<vmem>>, vector<128x128xf32>
    %cst_129 = arith.constant dense<0.000000e+00> : vector<2x128xf32>
    %134 = tpu.matmul %132, %133, %cst_129 {dimension_numbers = #tpu.dot_dimension_numbers<[1], [0], [0], [1], [0, 0, 1, 1], [], []>} : vector<2x128xf32>, vector<128x128xf32>, vector<2x128xf32> -> vector<2x128xf32>
    %c0_130 = arith.constant 0 : index
    %c0_131 = arith.constant 0 : index
    %135 = vector.load %arg15[%c0_130, %c0_131] : memref<1x128xf32, #tpu.memory_space<vmem>>, vector<1x128xf32>
    %136 = vector.broadcast %135 : vector<1x128xf32> to vector<2x128xf32>
    %137 = arith.addf %134, %136 : vector<2x128xf32>
    %cst_132 = arith.constant 0.000000e+00 : f32
    %138 = vector.broadcast %cst_132 : f32 to vector<2x128xf32>
    %139 = arith.cmpf oge, %137, %138 : vector<2x128xf32>
    %cst_133 = arith.constant 0.00999999977 : f32
    %140 = vector.broadcast %cst_133 : f32 to vector<2x128xf32>
    %141 = arith.mulf %140, %137 : vector<2x128xf32>
    %142 = arith.select %139, %137, %141 : vector<2x128xi1>, vector<2x128xf32>
    %c0_134 = arith.constant 0 : index
    %c0_135 = arith.constant 0 : index
    %143 = vector.load %arg16[%c0_134, %c0_135] : memref<128x128xf32, #tpu.memory_space<vmem>>, vector<128x128xf32>
    %cst_136 = arith.constant dense<0.000000e+00> : vector<2x128xf32>
    %144 = tpu.matmul %142, %143, %cst_136 {dimension_numbers = #tpu.dot_dimension_numbers<[1], [0], [0], [1], [0, 0, 1, 1], [], []>} : vector<2x128xf32>, vector<128x128xf32>, vector<2x128xf32> -> vector<2x128xf32>
    %c0_137 = arith.constant 0 : index
    %c0_138 = arith.constant 0 : index
    %145 = vector.load %arg17[%c0_137, %c0_138] : memref<1x128xf32, #tpu.memory_space<vmem>>, vector<1x128xf32>
    %146 = vector.broadcast %145 : vector<1x128xf32> to vector<2x128xf32>
    %147 = arith.addf %144, %146 : vector<2x128xf32>
    %c0_139 = arith.constant 0 : index
    %c0_140 = arith.constant 0 : index
    %c0_141 = arith.constant 0 : index
    %148 = vector.load %arg18[%c0_139, %c0_140, %c0_141] : memref<2x1x128xf32, #tpu.memory_space<vmem>>, vector<2x1x128xf32>
    %149 = vector.shape_cast %148 : vector<2x1x128xf32> to vector<2x128xf32>
    %150 = vector.shape_cast %147 : vector<2x128xf32> to vector<2x1x128xf32>
    tpu.vector_store %arg18[%c0_139, %c0_140, %c0_141], %150 {strides = array<i32>} : memref<2x1x128xf32, #tpu.memory_space<vmem>>, vector<2x1x128xf32>,
    return
  }
  func.func @transform_0(%arg0: i32) -> (i32, i32, i32) {
    %c0_i32 = arith.constant 0 : i32
    %c0_i32_0 = arith.constant 0 : i32
    %c0_i32_1 = arith.constant 0 : i32
    return %arg0, %c0_i32, %c0_i32_0 : i32, i32, i32
  }
  func.func @transform_1(%arg0: i32) -> (i32, i32, i32) {
    %c0_i32 = arith.constant 0 : i32
    %c0_i32_0 = arith.constant 0 : i32
    %c0_i32_1 = arith.constant 0 : i32
    %c0_i32_2 = arith.constant 0 : i32
    return %c0_i32, %c0_i32_0, %c0_i32_1 : i32, i32, i32
  }
  func.func @transform_2(%arg0: i32) -> (i32, i32) {
    %c0_i32 = arith.constant 0 : i32
    %c0_i32_0 = arith.constant 0 : i32
    %c0_i32_1 = arith.constant 0 : i32
    return %c0_i32, %c0_i32_0 : i32, i32
  }
  func.func @transform_3(%arg0: i32) -> (i32, i32, i32) {
    %c0_i32 = arith.constant 0 : i32
    %c0_i32_0 = arith.constant 0 : i32
    %c0_i32_1 = arith.constant 0 : i32
    %c0_i32_2 = arith.constant 0 : i32
    return %c0_i32, %c0_i32_0, %c0_i32_1 : i32, i32, i32
  }
  func.func @transform_4(%arg0: i32) -> (i32, i32) {
    %c0_i32 = arith.constant 0 : i32
    %c0_i32_0 = arith.constant 0 : i32
    %c0_i32_1 = arith.constant 0 : i32
    return %c0_i32, %c0_i32_0 : i32, i32
  }
  func.func @transform_5(%arg0: i32) -> (i32, i32) {
    %c0_i32 = arith.constant 0 : i32
    %c0_i32_0 = arith.constant 0 : i32
    %c0_i32_1 = arith.constant 0 : i32
    return %c0_i32, %c0_i32_0 : i32, i32
  }
  func.func @transform_6(%arg0: i32) -> (i32, i32) {
    %c0_i32 = arith.constant 0 : i32
    %c0_i32_0 = arith.constant 0 : i32
    %c0_i32_1 = arith.constant 0 : i32
    return %c0_i32, %c0_i32_0 : i32, i32
  }
  func.func @transform_7(%arg0: i32) -> (i32, i32, i32) {
    %c0_i32 = arith.constant 0 : i32
    %c0_i32_0 = arith.constant 0 : i32
    %c0_i32_1 = arith.constant 0 : i32
    %c0_i32_2 = arith.constant 0 : i32
    return %c0_i32, %c0_i32_0, %c0_i32_1 : i32, i32, i32
  }
  func.func @transform_8(%arg0: i32) -> (i32, i32) {
    %c0_i32 = arith.constant 0 : i32
    %c0_i32_0 = arith.constant 0 : i32
    %c0_i32_1 = arith.constant 0 : i32
    return %c0_i32, %c0_i32_0 : i32, i32
  }
  func.func @transform_9(%arg0: i32) -> (i32, i32, i32) {
    %c0_i32 = arith.constant 0 : i32
    %c0_i32_0 = arith.constant 0 : i32
    %c0_i32_1 = arith.constant 0 : i32
    %c0_i32_2 = arith.constant 0 : i32
    return %c0_i32, %c0_i32_0, %c0_i32_1 : i32, i32, i32
  }
  func.func @transform_10(%arg0: i32) -> (i32, i32) {
    %c0_i32 = arith.constant 0 : i32
    %c0_i32_0 = arith.constant 0 : i32
    %c0_i32_1 = arith.constant 0 : i32
    return %c0_i32, %c0_i32_0 : i32, i32
  }
  func.func @transform_11(%arg0: i32) -> (i32, i32) {
    %c0_i32 = arith.constant 0 : i32
    %c0_i32_0 = arith.constant 0 : i32
    %c0_i32_1 = arith.constant 0 : i32
    return %c0_i32, %c0_i32_0 : i32, i32
  }
  func.func @transform_12(%arg0: i32) -> (i32, i32) {
    %c0_i32 = arith.constant 0 : i32
    %c0_i32_0 = arith.constant 0 : i32
    %c0_i32_1 = arith.constant 0 : i32
    return %c0_i32, %c0_i32_0 : i32, i32
  }
  func.func @transform_13(%arg0: i32) -> (i32, i32) {
    %c0_i32 = arith.constant 0 : i32
    %c0_i32_0 = arith.constant 0 : i32
    %c0_i32_1 = arith.constant 0 : i32
    return %c0_i32, %c0_i32_0 : i32, i32
  }
  func.func @transform_14(%arg0: i32) -> (i32, i32) {
    %c0_i32 = arith.constant 0 : i32
    %c0_i32_0 = arith.constant 0 : i32
    %c0_i32_1 = arith.constant 0 : i32
    return %c0_i32, %c0_i32_0 : i32, i32
  }
  func.func @transform_15(%arg0: i32) -> (i32, i32) {
    %c0_i32 = arith.constant 0 : i32
    %c0_i32_0 = arith.constant 0 : i32
    %c0_i32_1 = arith.constant 0 : i32
    return %c0_i32, %c0_i32_0 : i32, i32
  }
  func.func @transform_16(%arg0: i32) -> (i32, i32) {
    %c0_i32 = arith.constant 0 : i32
    %c0_i32_0 = arith.constant 0 : i32
    %c0_i32_1 = arith.constant 0 : i32
    return %c0_i32, %c0_i32_0 : i32, i32
  }
  func.func @transform_17(%arg0: i32) -> (i32, i32, i32) {
    %c0_i32 = arith.constant 0 : i32
    %c0_i32_0 = arith.constant 0 : i32
    %c0_i32_1 = arith.constant 0 : i32
    return %arg0, %c0_i32, %c0_i32_0 : i32, i32, i32
  }
}

</mosaic_0001>

<llo_original>
// kernel: tpu_custom_call.1
$region0: #{tpu_custom_call.1}
  #allocation0 [shape = 'u32[]', space=smem, size = 0x4, offset = 0x4, fixed_abs, tag = 'smem constant byte address 0x4 - core index']
  #allocation1 [shape = 'u32[144,128]{1,0:T(1,128)}', space=vmem, size = 0x12000, scoped, tag = 'internal scratch']
  #allocation2 [shape = 'f32[2,24,128]{2,1,0:T(8,128)}', space=vmem, size = 0x6000, scoped, tag = 'scratch operand']
  %s0 = inlined_call_operand.hbm [shape: f32[2,16,128], index: 0, kind: input, shape index: {}]
  %s1 = inlined_call_operand.hbm [shape: f32[3,128,128], index: 1, kind: input, shape index: {}]
  %s2 = inlined_call_operand.vmem [shape: f32[1,128], index: 2, kind: input, shape index: {}]
  %s3 = inlined_call_operand.hbm [shape: f32[3,128,128], index: 3, kind: input, shape index: {}]
  %s4 = inlined_call_operand.vmem [shape: f32[1,128], index: 4, kind: input, shape index: {}]
  %s5 = inlined_call_operand.hbm [shape: f32[128,128], index: 5, kind: input, shape index: {}]
  %s6 = inlined_call_operand.vmem [shape: f32[1,128], index: 6, kind: input, shape index: {}]
  %s7 = inlined_call_operand.hbm [shape: f32[3,128,128], index: 7, kind: input, shape index: {}]
  %s8 = inlined_call_operand.vmem [shape: f32[1,128], index: 8, kind: input, shape index: {}]
  %s9 = inlined_call_operand.hbm [shape: f32[3,128,128], index: 9, kind: input, shape index: {}]
  %s10 = inlined_call_operand.vmem [shape: f32[1,128], index: 10, kind: input, shape index: {}]
  %s11 = inlined_call_operand.hbm [shape: f32[128,128], index: 11, kind: input, shape index: {}]
  %s12 = inlined_call_operand.vmem [shape: f32[1,128], index: 12, kind: input, shape index: {}]
  %s13 = inlined_call_operand.hbm [shape: f32[128,128], index: 13, kind: input, shape index: {}]
  %s14 = inlined_call_operand.vmem [shape: f32[1,128], index: 14, kind: input, shape index: {}]
  %s15 = inlined_call_operand.hbm [shape: f32[128,128], index: 15, kind: input, shape index: {}]
  %s16 = inlined_call_operand.vmem [shape: f32[1,128], index: 16, kind: input, shape index: {}]
  %s17 = inlined_call_operand.hbm [shape: f32[2,1,128], index: 17, kind: output, shape index: {}]
  %s18 = sld [smem:[#allocation0]]
  $region114: #{tpu_custom_call.1} parent=0
    _
  %s20 = ssub.s32 1, %s18
  %s21 = scalar_select 0, %s20, %s18
  $region1: #{tpu_custom_call.1} parent=0
    #allocation3 [shape = 'u8[16384]{0}', space=vmem, size = 0x4000, scoped, tag = 'input window, operand 0, single buffered']
    #allocation4 [shape = 's32[1]{0}', space=sflag, size = 0x4, scoped, tag = 'scoped memory for tpu_custom_call.1']
    #allocation5 [shape = 's32[1]{0}', space=sflag, size = 0x4, scoped, tag = 'scoped memory for tpu_custom_call.1']
    #allocation6 [shape = 'u8[196608]{0}', space=vmem, size = 0x30000, scoped, tag = 'input window, operand 1, single buffered']
    #allocation7 [shape = 's32[1]{0}', space=sflag, size = 0x4, scoped, tag = 'scoped memory for tpu_custom_call.1']
    #allocation8 [shape = 'u8[196608]{0}', space=vmem, size = 0x30000, scoped, tag = 'input window, operand 3, single buffered']
    #allocation9 [shape = 'u8[65536]{0}', space=vmem, size = 0x10000, scoped, tag = 'input window, operand 5, single buffered']
    #allocation10 [shape = 's32[1]{0}', space=sflag, size = 0x4, scoped, tag = 'scoped memory for tpu_custom_call.1']
    #allocation11 [shape = 'u8[196608]{0}', space=vmem, size = 0x30000, scoped, tag = 'input window, operand 7, single buffered']
    #allocation12 [shape = 'u8[196608]{0}', space=vmem, size = 0x30000, scoped, tag = 'input window, operand 9, single buffered']
    #allocation13 [shape = 's32[1]{0}', space=sflag, size = 0x4, scoped, tag = 'scoped memory for tpu_custom_call.1']
    #allocation14 [shape = 'u8[65536]{0}', space=vmem, size = 0x10000, scoped, tag = 'input window, operand 11, single buffered']
    #allocation15 [shape = 'u8[65536]{0}', space=vmem, size = 0x10000, scoped, tag = 'input window, operand 13, single buffered']
    #allocation16 [shape = 's32[1]{0}', space=sflag, size = 0x4, scoped, tag = 'scoped memory for tpu_custom_call.1']
    #allocation17 [shape = 'u8[65536]{0}', space=vmem, size = 0x10000, scoped, tag = 'input window, operand 15, single buffered']
    #allocation18 [shape = 'u8[1024]{0}', space=vmem, size = 0x400, scoped, tag = 'output window, operand 0, single buffered']
    %22 = vsyncpa [#allocation4], 0
    %23 = vsyncpa [#allocation7], 0
    %24 = vsyncpa [#allocation10], 0
    %25 = vsyncpa [#allocation13], 0
    %26 = vsyncpa [#allocation16], 0
    %27 = vsyncpa [#allocation5], 0
    // Predicated region
    $region2: #{tpu_custom_call.1} parent=1 // pred_check
      _
    $region3: #{tpu_custom_call.1} parent=1 // pred_check_branch
      %29 = sbr.rel (0) target = $region5
    $region4: #{tpu_custom_call.1} parent=1 // pred_region
      %s31 = ssub.s32 512, 512
      %32 = vsyncadd [#allocation4], %s31
      %s33 = sshll.u32 [#allocation3], 4
      %s34 = int_to_ptr.vmem [resolvable:$true] %s33
      %39 = dma.hbm_to_vmem [thread:$0]  %s0, 512, %s34, [#allocation4], 128, 128, 8
    $region5: #{tpu_custom_call.1} parent=1 // pred_fallthru
      _
    // Predicated region
    $region6: #{tpu_custom_call.1} parent=1 // pred_check
      _
    $region7: #{tpu_custom_call.1} parent=1 // pred_check_branch
      %41 = sbr.rel (0) target = $region9
    $region8: #{tpu_custom_call.1} parent=1 // pred_region
      %s43 = ssub.s32 6144, 6144
      %44 = vsyncadd [#allocation7], %s43
      %s45 = sshll.u32 [#allocation6], 4
      %s46 = int_to_ptr.vmem [resolvable:$true] %s45
      %51 = dma.hbm_to_vmem [thread:$0]  %s1, 6144, %s46, [#allocation7], 128, 128, 8
    $region9: #{tpu_custom_call.1} parent=1 // pred_fallthru
      _
    // Predicated region
    $region10: #{tpu_custom_call.1} parent=1 // pred_check
      _
    $region11: #{tpu_custom_call.1} parent=1 // pred_check_branch
      %53 = sbr.rel (0) target = $region13
    $region12: #{tpu_custom_call.1} parent=1 // pred_region
      _
    $region13: #{tpu_custom_call.1} parent=1 // pred_fallthru
      _
    // Predicated region
    $region14: #{tpu_custom_call.1} parent=1 // pred_check
      _
    $region15: #{tpu_custom_call.1} parent=1 // pred_check_branch
      %55 = sbr.rel (0) target = $region17
    $region16: #{tpu_custom_call.1} parent=1 // pred_region
      %s57 = ssub.s32 6144, 6144
      %58 = vsyncadd [#allocation7], %s57
      %s59 = sshll.u32 [#allocation8], 4
      %s60 = int_to_ptr.vmem [resolvable:$true] %s59
      %65 = dma.hbm_to_vmem [thread:$0]  %s3, 6144, %s60, [#allocation7], 128, 128, 8
    $region17: #{tpu_custom_call.1} parent=1 // pred_fallthru
      _
    // Predicated region
    $region18: #{tpu_custom_call.1} parent=1 // pred_check
      _
    $region19: #{tpu_custom_call.1} parent=1 // pred_check_branch
      %67 = sbr.rel (0) target = $region21
    $region20: #{tpu_custom_call.1} parent=1 // pred_region
      _
    $region21: #{tpu_custom_call.1} parent=1 // pred_fallthru
      _
    // Predicated region
    $region22: #{tpu_custom_call.1} parent=1 // pred_check
      _
    $region23: #{tpu_custom_call.1} parent=1 // pred_check_branch
      %69 = sbr.rel (0) target = $region25
    $region24: #{tpu_custom_call.1} parent=1 // pred_region
      %s71 = ssub.s32 2048, 2048
      %72 = vsyncadd [#allocation10], %s71
      %s73 = sshll.u32 [#allocation9], 4
      %s74 = int_to_ptr.vmem [resolvable:$true] %s73
      %79 = dma.hbm_to_vmem [thread:$0]  %s5, 2048, %s74, [#allocation10], 128, 128, 8
    $region25: #{tpu_custom_call.1} parent=1 // pred_fallthru
      _
    // Predicated region
    $region26: #{tpu_custom_call.1} parent=1 // pred_check
      _
    $region27: #{tpu_custom_call.1} parent=1 // pred_check_branch
      %81 = sbr.rel (0) target = $region29
    $region28: #{tpu_custom_call.1} parent=1 // pred_region
      _
    $region29: #{tpu_custom_call.1} parent=1 // pred_fallthru
      _
    // Predicated region
    $region30: #{tpu_custom_call.1} parent=1 // pred_check
      _
    $region31: #{tpu_custom_call.1} parent=1 // pred_check_branch
      %83 = sbr.rel (0) target = $region33
    $region32: #{tpu_custom_call.1} parent=1 // pred_region
      %s85 = ssub.s32 6144, 6144
      %86 = vsyncadd [#allocation10], %s85
      %s87 = sshll.u32 [#allocation11], 4
      %s88 = int_to_ptr.vmem [resolvable:$true] %s87
      %93 = dma.hbm_to_vmem [thread:$0]  %s7, 6144, %s88, [#allocation10], 128, 128, 8
    $region33: #{tpu_custom_call.1} parent=1 // pred_fallthru
      _
    // Predicated region
    $region34: #{tpu_custom_call.1} parent=1 // pred_check
      _
    $region35: #{tpu_custom_call.1} parent=1 // pred_check_branch
      %95 = sbr.rel (0) target = $region37
    $region36: #{tpu_custom_call.1} parent=1 // pred_region
      _
    $region37: #{tpu_custom_call.1} parent=1 // pred_fallthru
      _
    // Predicated region
    $region38: #{tpu_custom_call.1} parent=1 // pred_check
      _
    $region39: #{tpu_custom_call.1} parent=1 // pred_check_branch
      %97 = sbr.rel (0) target = $region41
    $region40: #{tpu_custom_call.1} parent=1 // pred_region
      %s99 = ssub.s32 6144, 6144
      %100 = vsyncadd [#allocation13], %s99
      %s101 = sshll.u32 [#allocation12], 4
      %s102 = int_to_ptr.vmem [resolvable:$true] %s101
      %107 = dma.hbm_to_vmem [thread:$0]  %s9, 6144, %s102, [#allocation13], 128, 128, 8
    $region41: #{tpu_custom_call.1} parent=1 // pred_fallthru
      _
    // Predicated region
    $region42: #{tpu_custom_call.1} parent=1 // pred_check
      _
    $region43: #{tpu_custom_call.1} parent=1 // pred_check_branch
      %109 = sbr.rel (0) target = $region45
    $region44: #{tpu_custom_call.1} parent=1 // pred_region
      _
    $region45: #{tpu_custom_call.1} parent=1 // pred_fallthru
      _
    // Predicated region
    $region46: #{tpu_custom_call.1} parent=1 // pred_check
      _
    $region47: #{tpu_custom_call.1} parent=1 // pred_check_branch
      %111 = sbr.rel (0) target = $region49
    $region48: #{tpu_custom_call.1} parent=1 // pred_region
      %s113 = ssub.s32 2048, 2048
      %114 = vsyncadd [#allocation13], %s113
      %s115 = sshll.u32 [#allocation14], 4
      %s116 = int_to_ptr.vmem [resolvable:$true] %s115
      %121 = dma.hbm_to_vmem [thread:$0]  %s11, 2048, %s116, [#allocation13], 128, 128, 8
    $region49: #{tpu_custom_call.1} parent=1 // pred_fallthru
      _
    // Predicated region
    $region50: #{tpu_custom_call.1} parent=1 // pred_check
      _
    $region51: #{tpu_custom_call.1} parent=1 // pred_check_branch
      %123 = sbr.rel (0) target = $region53
    $region52: #{tpu_custom_call.1} parent=1 // pred_region
      _
    $region53: #{tpu_custom_call.1} parent=1 // pred_fallthru
      _
    // Predicated region
    $region54: #{tpu_custom_call.1} parent=1 // pred_check
      _
    $region55: #{tpu_custom_call.1} parent=1 // pred_check_branch
      %125 = sbr.rel (0) target = $region57
    $region56: #{tpu_custom_call.1} parent=1 // pred_region
      %s127 = ssub.s32 2048, 2048
      %128 = vsyncadd [#allocation16], %s127
      %s129 = sshll.u32 [#allocation15], 4
      %s130 = int_to_ptr.vmem [resolvable:$true] %s129
      %135 = dma.hbm_to_vmem [thread:$0]  %s13, 2048, %s130, [#allocation16], 128, 128, 8
    $region57: #{tpu_custom_call.1} parent=1 // pred_fallthru
      _
    // Predicated region
    $region58: #{tpu_custom_call.1} parent=1 // pred_check
      _
    $region59: #{tpu_custom_call.1} parent=1 // pred_check_branch
      %137 = sbr.rel (0) target = $region61
    $region60: #{tpu_custom_call.1} parent=1 // pred_region
      _
    $region61: #{tpu_custom_call.1} parent=1 // pred_fallthru
      _
    // Predicated region
    $region62: #{tpu_custom_call.1} parent=1 // pred_check
      _
    $region63: #{tpu_custom_call.1} parent=1 // pred_check_branch
      %139 = sbr.rel (0) target = $region65
    $region64: #{tpu_custom_call.1} parent=1 // pred_region
      %s141 = ssub.s32 2048, 2048
      %142 = vsyncadd [#allocation16], %s141
      %s143 = sshll.u32 [#allocation17], 4
      %s144 = int_to_ptr.vmem [resolvable:$true] %s143
      %149 = dma.hbm_to_vmem [thread:$0]  %s15, 2048, %s144, [#allocation16], 128, 128, 8
    $region65: #{tpu_custom_call.1} parent=1 // pred_fallthru
      _
    // Predicated region
    $region66: #{tpu_custom_call.1} parent=1 // pred_check
      _
    $region67: #{tpu_custom_call.1} parent=1 // pred_check_branch
      %151 = sbr.rel (0) target = $region69
    $region68: #{tpu_custom_call.1} parent=1 // pred_region
      _
    $region69: #{tpu_custom_call.1} parent=1 // pred_fallthru
      _
    // Predicated region
    $region70: #{tpu_custom_call.1} parent=1 // pred_check
      _
    $region71: #{tpu_custom_call.1} parent=1 // pred_check_branch
      %153 = sbr.rel (0) target = $region73
    $region72: #{tpu_custom_call.1} parent=1 // pred_region
      %154 = dma.done [#allocation4], 512
    $region73: #{tpu_custom_call.1} parent=1 // pred_fallthru
      _
    // Predicated region
    $region74: #{tpu_custom_call.1} parent=1 // pred_check
      _
    $region75: #{tpu_custom_call.1} parent=1 // pred_check_branch
      %156 = sbr.rel (0) target = $region77
    $region76: #{tpu_custom_call.1} parent=1 // pred_region
      %157 = dma.done [#allocation7], 6144
    $region77: #{tpu_custom_call.1} parent=1 // pred_fallthru
      _
    // Predicated region
    $region78: #{tpu_custom_call.1} parent=1 // pred_check
      _
    $region79: #{tpu_custom_call.1} parent=1 // pred_check_branch
      %159 = sbr.rel (0) target = $region81
    $region80: #{tpu_custom_call.1} parent=1 // pred_region
      %160 = dma.done [#allocation7], 6144
    $region81: #{tpu_custom_call.1} parent=1 // pred_fallthru
      _
    // Predicated region
    $region82: #{tpu_custom_call.1} parent=1 // pred_check
      _
    $region83: #{tpu_custom_call.1} parent=1 // pred_check_branch
      %162 = sbr.rel (0) target = $region85
    $region84: #{tpu_custom_call.1} parent=1 // pred_region
      %163 = dma.done [#allocation10], 2048
    $region85: #{tpu_custom_call.1} parent=1 // pred_fallthru
      _
    // Predicated region
    $region86: #{tpu_custom_call.1} parent=1 // pred_check
      _
    $region87: #{tpu_custom_call.1} parent=1 // pred_check_branch
      %165 = sbr.rel (0) target = $region89
    $region88: #{tpu_custom_call.1} parent=1 // pred_region
      %166 = dma.done [#allocation10], 6144
    $region89: #{tpu_custom_call.1} parent=1 // pred_fallthru
      _
    // Predicated region
    $region90: #{tpu_custom_call.1} parent=1 // pred_check
      _
    $region91: #{tpu_custom_call.1} parent=1 // pred_check_branch
      %168 = sbr.rel (0) target = $region93
    $region92: #{tpu_custom_call.1} parent=1 // pred_region
      %169 = dma.done [#allocation13], 6144
    $region93: #{tpu_custom_call.1} parent=1 // pred_fallthru
      _
    // Predicated region
    $region94: #{tpu_custom_call.1} parent=1 // pred_check
      _
    $region95: #{tpu_custom_call.1} parent=1 // pred_check_branch
      %171 = sbr.rel (0) target = $region97
    $region96: #{tpu_custom_call.1} parent=1 // pred_region
      %172 = dma.done [#allocation13], 2048
    $region97: #{tpu_custom_call.1} parent=1 // pred_fallthru
      _
    // Predicated region
    $region98: #{tpu_custom_call.1} parent=1 // pred_check
      _
    $region99: #{tpu_custom_call.1} parent=1 // pred_check_branch
      %174 = sbr.rel (0) target = $region101
    $region100: #{tpu_custom_call.1} parent=1 // pred_region
      %175 = dma.done [#allocation16], 2048
    $region101: #{tpu_custom_call.1} parent=1 // pred_fallthru
      _
    // Predicated region
    $region102: #{tpu_custom_call.1} parent=1 // pred_check
      _
    $region103: #{tpu_custom_call.1} parent=1 // pred_check_branch
      %177 = sbr.rel (0) target = $region105
    $region104: #{tpu_custom_call.1} parent=1 // pred_region
      %178 = dma.done [#allocation16], 2048
    $region105: #{tpu_custom_call.1} parent=1 // pred_fallthru
      _
    %179 = vst [vmem:[#allocation2] sm:$0xff] 0.0
    %180 = vst [vmem:[#allocation2 + $0x18] sm:$0xff] 0.0
    %v181 = vld [vmem:[#allocation3] sm:$0xff]
    %v182 = vld [vmem:[#allocation3 + $0x8] sm:$0xff]
    %v183 = vld [vmem:[#allocation3 + $0x10] sm:$0xff]
    %v184 = vld [vmem:[#allocation3 + $0x18] sm:$0xff]
    %v185 = vld [vmem:[#allocation9] sm:$0xff]
    %v186 = vld [vmem:[#allocation9 + $0x8] sm:$0xff]
    %v187 = vld [vmem:[#allocation9 + $0x10] sm:$0xff]
    %v188 = vld [vmem:[#allocation9 + $0x18] sm:$0xff]
    %v189 = vld [vmem:[#allocation9 + $0x20] sm:$0xff]
    %v190 = vld [vmem:[#allocation9 + $0x28] sm:$0xff]
    %v191 = vld [vmem:[#allocation9 + $0x30] sm:$0xff]
    %v192 = vld [vmem:[#allocation9 + $0x38] sm:$0xff]
    %v193 = vld [vmem:[#allocation9 + $0x40] sm:$0xff]
    %v194 = vld [vmem:[#allocation9 + $0x48] sm:$0xff]
    %v195 = vld [vmem:[#allocation9 + $0x50] sm:$0xff]
    %v196 = vld [vmem:[#allocation9 + $0x58] sm:$0xff]
    %v197 = vld [vmem:[#allocation9 + $0x60] sm:$0xff]
    %v198 = vld [vmem:[#allocation9 + $0x68] sm:$0xff]
    %v199 = vld [vmem:[#allocation9 + $0x70] sm:$0xff]
    %v200 = vld [vmem:[#allocation9 + $0x78] sm:$0xff]
    %v201 = vld [vmem:[%s6] sm:$0x1]
    %v203 = vlaneseq
    %v204 = vshrl.u32 %v203, 7
    %v205 = vsub.s32 0, %v204
    %v206 = vrot.slane %v201, %v205
    %208 = vmatprep.subr.mxu0 0.0
    %209 = vmatpush1.msra.mxu0 %v185
    %210 = vmatprep.subr.mxu0 0.0
    %211 = vmatpush1.msra.mxu0 %v186
    %212 = vmatprep.subr.mxu0 0.0
    %213 = vmatpush1.msra.mxu0 %v187
    %214 = vmatprep.subr.mxu0 0.0
    %215 = vmatpush1.msra.mxu0 %v188
    %216 = vmatprep.subr.mxu0 0.0
    %217 = vmatpush1.msra.mxu0 %v189
    %218 = vmatprep.subr.mxu0 0.0
    %219 = vmatpush1.msra.mxu0 %v190
    %220 = vmatprep.subr.mxu0 0.0
    %221 = vmatpush1.msra.mxu0 %v191
    %222 = vmatprep.subr.mxu0 0.0
    %223 = vmatpush1.msra.mxu0 %v192
    %224 = vmatprep.subr.mxu0 0.0
    %225 = vmatpush1.msra.mxu0 %v193
    %226 = vmatprep.subr.mxu0 0.0
    %227 = vmatpush1.msra.mxu0 %v194
    %228 = vmatprep.subr.mxu0 0.0
    %229 = vmatpush1.msra.mxu0 %v195
    %230 = vmatprep.subr.mxu0 0.0
    %231 = vmatpush1.msra.mxu0 %v196
    %232 = vmatprep.subr.mxu0 0.0
    %233 = vmatpush1.msra.mxu0 %v197
    %234 = vmatprep.subr.mxu0 0.0
    %235 = vmatpush1.msra.mxu0 %v198
    %236 = vmatprep.subr.mxu0 0.0
    %237 = vmatpush1.msra.mxu0 %v199
    %238 = vmatprep.subr.mxu0 0.0
    %239 = vmatpush1.msra.mxu0 %v200
    %240 = vmatprep.subr.mxu0 0.0
    %241 = vmatpush1.msra.mxu0 0.0
    %242 = vmatprep.subr.mxu0 0.0
    %243 = vmatpush1.msra.mxu0 0.0
    %244 = vmatprep.subr.mxu0 0.0
    %245 = vmatpush1.msra.mxu0 0.0
    %246 = vmatprep.subr.mxu0 0.0
    %247 = vmatpush1.msra.mxu0 0.0
    %248 = vmatprep.subr.mxu0 0.0
    %249 = vmatpush1.msra.mxu0 0.0
    %250 = vmatprep.subr.mxu0 0.0
    %251 = vmatpush1.msra.mxu0 0.0
    %252 = vmatprep.subr.mxu0 0.0
    %253 = vmatpush1.msra.mxu0 0.0
    %254 = vmatprep.subr.mxu0 0.0
    %255 = vmatpush1.msra.mxu0 0.0
    %256 = vmatprep.subr.mxu0 0.0
    %257 = vmatpush1.msra.mxu0 0.0
    %258 = vmatprep.subr.mxu0 0.0
    %259 = vmatpush1.msra.mxu0 0.0
    %260 = vmatprep.subr.mxu0 0.0
    %261 = vmatpush1.msra.mxu0 0.0
    %262 = vmatprep.subr.mxu0 0.0
    %263 = vmatpush1.msra.mxu0 0.0
    %264 = vmatprep.subr.mxu0 0.0
    %265 = vmatpush1.msra.mxu0 0.0
    %266 = vmatprep.subr.mxu0 0.0
    %267 = vmatpush1.msra.mxu0 0.0
    %268 = vmatprep.subr.mxu0 0.0
    %269 = vmatpush1.msra.mxu0 0.0
    %270 = vmatprep.subr.mxu0 0.0
    %271 = vmatpush1.msra.mxu0 0.0
    %272 = vmatprep.mubr.f32.mxu0 0.0
    %273 = vmatmul.mubr.f32.gmra.mrb[0].mxu0 %v181
    %v274 = vpop.f32.mrb[0].mxu0
    %v275 = vadd.f32 %v206, %v274
    %v276 = vpop.f32.mrb[0].mxu0
    %277 = vmatprep.mubr.f32.mxu0 0.0
    %278 = vmatmul.mubr.f32.gmra.mrb[0].mxu0 %v182
    %v279 = vpop.f32.mrb[0].mxu0
    %v280 = vadd.f32 %v206, %v279
    %v281 = vpop.f32.mrb[0].mxu0
    %282 = vmatprep.mubr.f32.mxu0 0.0
    %283 = vmatmul.mubr.f32.gmra.mrb[0].mxu0 %v183
    %v284 = vpop.f32.mrb[0].mxu0
    %v285 = vadd.f32 %v206, %v284
    %v286 = vpop.f32.mrb[0].mxu0
    %287 = vmatprep.mubr.f32.mxu0 0.0
    %288 = vmatmul.mubr.f32.gmra.mrb[0].mxu0 %v184
    %v289 = vpop.f32.mrb[0].mxu0
    %v290 = vadd.f32 %v206, %v289
    %v291 = vpop.f32.mrb[0].mxu0
    %292 = vdwg.mxu0
    %293 = vst [vmem:[#allocation2 + $0x8] sm:$0xff] %v181
    %294 = vst [vmem:[#allocation2 + $0x10] sm:$0xff] %v182
    %295 = vst [vmem:[#allocation2 + $0x20] sm:$0xff] %v183
    %296 = vst [vmem:[#allocation2 + $0x28] sm:$0xff] %v184
    %v297 = vld [vmem:[#allocation2 + $0x6] sm:$0xff]
    %v298 = vld [vmem:[#allocation2 + $0xe] sm:$0xff]
    %v299 = vld [vmem:[#allocation2 + $0x1e] sm:$0xff]
    %v300 = vld [vmem:[#allocation2 + $0x26] sm:$0xff]
    %v301 = vld [vmem:[#allocation6] sm:$0xff]
    %v302 = vld [vmem:[#allocation6 + $0x8] sm:$0xff]
    %v303 = vld [vmem:[#allocation6 + $0x10] sm:$0xff]
    %v304 = vld [vmem:[#allocation6 + $0x18] sm:$0xff]
    %v305 = vld [vmem:[#allocation6 + $0x20] sm:$0xff]
    %v306 = vld [vmem:[#allocation6 + $0x28] sm:$0xff]
    %v307 = vld [vmem:[#allocation6 + $0x30] sm:$0xff]
    %v308 = vld [vmem:[#allocation6 + $0x38] sm:$0xff]
    %v309 = vld [vmem:[#allocation6 + $0x40] sm:$0xff]
    %v310 = vld [vmem:[#allocation6 + $0x48] sm:$0xff]
    %v311 = vld [vmem:[#allocation6 + $0x50] sm:$0xff]
    %v312 = vld [vmem:[#allocation6 + $0x58] sm:$0xff]
    %v313 = vld [vmem:[#allocation6 + $0x60] sm:$0xff]
    %v314 = vld [vmem:[#allocation6 + $0x68] sm:$0xff]
    %v315 = vld [vmem:[#allocation6 + $0x70] sm:$0xff]
    %v316 = vld [vmem:[#allocation6 + $0x78] sm:$0xff]
    %v317 = vld [vmem:[#allocation2 + $0x7] sm:$0xff]
    %v318 = vld [vmem:[#allocation2 + $0xf] sm:$0xff]
    %v319 = vld [vmem:[#allocation2 + $0x1f] sm:$0xff]
    %v320 = vld [vmem:[#allocation2 + $0x27] sm:$0xff]
    %s321 = scalar_lea.vmem [#allocation6], 128
    %v322 = vld [vmem:[%s321] sm:$0xff]
    %v323 = vld [vmem:[%s321 + $0x8] sm:$0xff]
    %v324 = vld [vmem:[%s321 + $0x10] sm:$0xff]
    %v325 = vld [vmem:[%s321 + $0x18] sm:$0xff]
    %v326 = vld [vmem:[%s321 + $0x20] sm:$0xff]
    %v327 = vld [vmem:[%s321 + $0x28] sm:$0xff]
    %v328 = vld [vmem:[%s321 + $0x30] sm:$0xff]
    %v329 = vld [vmem:[%s321 + $0x38] sm:$0xff]
    %v330 = vld [vmem:[%s321 + $0x40] sm:$0xff]
    %v331 = vld [vmem:[%s321 + $0x48] sm:$0xff]
    %v332 = vld [vmem:[%s321 + $0x50] sm:$0xff]
    %v333 = vld [vmem:[%s321 + $0x58] sm:$0xff]
    %v334 = vld [vmem:[%s321 + $0x60] sm:$0xff]
    %v335 = vld [vmem:[%s321 + $0x68] sm:$0xff]
    %v336 = vld [vmem:[%s321 + $0x70] sm:$0xff]
    %v337 = vld [vmem:[%s321 + $0x78] sm:$0xff]
    %338 = vmatprep.subr.mxu0 0.0
    %339 = vmatpush1.msra.mxu0 %v322
    %340 = vmatprep.subr.mxu0 0.0
    %341 = vmatpush1.msra.mxu0 %v323
    %342 = vmatprep.subr.mxu0 0.0
    %343 = vmatpush1.msra.mxu0 %v324
    %344 = vmatprep.subr.mxu0 0.0
    %345 = vmatpush1.msra.mxu0 %v325
    %346 = vmatprep.subr.mxu0 0.0
    %347 = vmatpush1.msra.mxu0 %v326
    %348 = vmatprep.subr.mxu0 0.0
    %349 = vmatpush1.msra.mxu0 %v327
    %350 = vmatprep.subr.mxu0 0.0
    %351 = vmatpush1.msra.mxu0 %v328
    %352 = vmatprep.subr.mxu0 0.0
    %353 = vmatpush1.msra.mxu0 %v329
    %354 = vmatprep.subr.mxu0 0.0
    %355 = vmatpush1.msra.mxu0 %v330
    %356 = vmatprep.subr.mxu0 0.0
    %357 = vmatpush1.msra.mxu0 %v331
    %358 = vmatprep.subr.mxu0 0.0
    %359 = vmatpush1.msra.mxu0 %v332
    %360 = vmatprep.subr.mxu0 0.0
    %361 = vmatpush1.msra.mxu0 %v333
    %362 = vmatprep.subr.mxu0 0.0
    %363 = vmatpush1.msra.mxu0 %v334
    %364 = vmatprep.subr.mxu0 0.0
    %365 = vmatpush1.msra.mxu0 %v335
    %366 = vmatprep.subr.mxu0 0.0
    %367 = vmatpush1.msra.mxu0 %v336
    %368 = vmatprep.subr.mxu0 0.0
    %369 = vmatpush1.msra.mxu0 %v337
    %370 = vmatprep.subr.mxu0 0.0
    %371 = vmatpush1.msra.mxu0 0.0
    %372 = vmatprep.subr.mxu0 0.0
    %373 = vmatpush1.msra.mxu0 0.0
    %374 = vmatprep.subr.mxu0 0.0
    %375 = vmatpush1.msra.mxu0 0.0
    %376 = vmatprep.subr.mxu0 0.0
    %377 = vmatpush1.msra.mxu0 0.0
    %378 = vmatprep.subr.mxu0 0.0
    %379 = vmatpush1.msra.mxu0 0.0
    %380 = vmatprep.subr.mxu0 0.0
    %381 = vmatpush1.msra.mxu0 0.0
    %382 = vmatprep.subr.mxu0 0.0
    %383 = vmatpush1.msra.mxu0 0.0
    %384 = vmatprep.subr.mxu0 0.0
    %385 = vmatpush1.msra.mxu0 0.0
    %386 = vmatprep.subr.mxu0 0.0
    %387 = vmatpush1.msra.mxu0 0.0
    %388 = vmatprep.subr.mxu0 0.0
    %389 = vmatpush1.msra.mxu0 0.0
    %390 = vmatprep.subr.mxu0 0.0
    %391 = vmatpush1.msra.mxu0 0.0
    %392 = vmatprep.subr.mxu0 0.0
    %393 = vmatpush1.msra.mxu0 0.0
    %394 = vmatprep.subr.mxu0 0.0
    %395 = vmatpush1.msra.mxu0 0.0
    %396 = vmatprep.subr.mxu0 0.0
    %397 = vmatpush1.msra.mxu0 0.0
    %398 = vmatprep.subr.mxu0 0.0
    %399 = vmatpush1.msra.mxu0 0.0
    %400 = vmatprep.subr.mxu0 0.0
    %401 = vmatpush1.msra.mxu0 0.0
    %402 = vmatprep.mubr.f32.mxu0 0.0
    %403 = vmatmul.mubr.f32.gmra.mrb[0].mxu0 %v317
    %v404 = vpop.f32.mrb[0].mxu0
    %v405 = vadd.f32 0.0, %v404
    %v406 = vpop.f32.mrb[0].mxu0
    %407 = vmatprep.mubr.f32.mxu0 0.0
    %408 = vmatmul.mubr.f32.gmra.mrb[0].mxu0 %v318
    %v409 = vpop.f32.mrb[0].mxu0
    %v410 = vadd.f32 0.0, %v409
    %v411 = vpop.f32.mrb[0].mxu0
    %412 = vmatprep.mubr.f32.mxu0 0.0
    %413 = vmatmul.mubr.f32.gmra.mrb[0].mxu0 %v319
    %v414 = vpop.f32.mrb[0].mxu0
    %v415 = vadd.f32 0.0, %v414
    %v416 = vpop.f32.mrb[0].mxu0
    %417 = vmatprep.mubr.f32.mxu0 0.0
    %418 = vmatmul.mubr.f32.gmra.mrb[0].mxu0 %v320
    %v419 = vpop.f32.mrb[0].mxu0
    %v420 = vadd.f32 0.0, %v419
    %v421 = vpop.f32.mrb[0].mxu0
    %422 = vdwg.mxu0
    %423 = vmatprep.subr.mxu0 0.0
    %424 = vmatpush1.msra.mxu0 %v301
    %425 = vmatprep.subr.mxu0 0.0
    %426 = vmatpush1.msra.mxu0 %v302
    %427 = vmatprep.subr.mxu0 0.0
    %428 = vmatpush1.msra.mxu0 %v303
    %429 = vmatprep.subr.mxu0 0.0
    %430 = vmatpush1.msra.mxu0 %v304
    %431 = vmatprep.subr.mxu0 0.0
    %432 = vmatpush1.msra.mxu0 %v305
    %433 = vmatprep.subr.mxu0 0.0
    %434 = vmatpush1.msra.mxu0 %v306
    %435 = vmatprep.subr.mxu0 0.0
    %436 = vmatpush1.msra.mxu0 %v307
    %437 = vmatprep.subr.mxu0 0.0
    %438 = vmatpush1.msra.mxu0 %v308
    %439 = vmatprep.subr.mxu0 0.0
    %440 = vmatpush1.msra.mxu0 %v309
    %441 = vmatprep.subr.mxu0 0.0
    %442 = vmatpush1.msra.mxu0 %v310
    %443 = vmatprep.subr.mxu0 0.0
    %444 = vmatpush1.msra.mxu0 %v311
    %445 = vmatprep.subr.mxu0 0.0
    %446 = vmatpush1.msra.mxu0 %v312
    %447 = vmatprep.subr.mxu0 0.0
    %448 = vmatpush1.msra.mxu0 %v313
    %449 = vmatprep.subr.mxu0 0.0
    %450 = vmatpush1.msra.mxu0 %v314
    %451 = vmatprep.subr.mxu0 0.0
    %452 = vmatpush1.msra.mxu0 %v315
    %453 = vmatprep.subr.mxu0 0.0
    %454 = vmatpush1.msra.mxu0 %v316
    %455 = vmatprep.subr.mxu0 0.0
    %456 = vmatpush1.msra.mxu0 0.0
    %457 = vmatprep.subr.mxu0 0.0
    %458 = vmatpush1.msra.mxu0 0.0
    %459 = vmatprep.subr.mxu0 0.0
    %460 = vmatpush1.msra.mxu0 0.0
    %461 = vmatprep.subr.mxu0 0.0
    %462 = vmatpush1.msra.mxu0 0.0
    %463 = vmatprep.subr.mxu0 0.0
    %464 = vmatpush1.msra.mxu0 0.0
    %465 = vmatprep.subr.mxu0 0.0
    %466 = vmatpush1.msra.mxu0 0.0
    %467 = vmatprep.subr.mxu0 0.0
    %468 = vmatpush1.msra.mxu0 0.0
    %469 = vmatprep.subr.mxu0 0.0
    %470 = vmatpush1.msra.mxu0 0.0
    %471 = vmatprep.subr.mxu0 0.0
    %472 = vmatpush1.msra.mxu0 0.0
    %473 = vmatprep.subr.mxu0 0.0
    %474 = vmatpush1.msra.mxu0 0.0
    %475 = vmatprep.subr.mxu0 0.0
    %476 = vmatpush1.msra.mxu0 0.0
    %477 = vmatprep.subr.mxu0 0.0
    %478 = vmatpush1.msra.mxu0 0.0
    %479 = vmatprep.subr.mxu0 0.0
    %480 = vmatpush1.msra.mxu0 0.0
    %481 = vmatprep.subr.mxu0 0.0
    %482 = vmatpush1.msra.mxu0 0.0
    %483 = vmatprep.subr.mxu0 0.0
    %484 = vmatpush1.msra.mxu0 0.0
    %485 = vmatprep.subr.mxu0 0.0
    %486 = vmatpush1.msra.mxu0 0.0
    %487 = vmatprep.mubr.f32.mxu0 0.0
    %488 = vmatmul.mubr.f32.gmra.mrb[0].mxu0 %v297
    %v489 = vpop.f32.mrb[0].mxu0
    %v490 = vadd.f32 %v405, %v489
    %v491 = vpop.f32.mrb[0].mxu0
    %492 = vmatprep.mubr.f32.mxu0 0.0
    %493 = vmatmul.mubr.f32.gmra.mrb[0].mxu0 %v298
    %v494 = vpop.f32.mrb[0].mxu0
    %v495 = vadd.f32 %v410, %v494
    %v496 = vpop.f32.mrb[0].mxu0
    %497 = vmatprep.mubr.f32.mxu0 0.0
    %498 = vmatmul.mubr.f32.gmra.mrb[0].mxu0 %v299
    %v499 = vpop.f32.mrb[0].mxu0
    %v500 = vadd.f32 %v415, %v499
    %v501 = vpop.f32.mrb[0].mxu0
    %502 = vmatprep.mubr.f32.mxu0 0.0
    %503 = vmatmul.mubr.f32.gmra.mrb[0].mxu0 %v300
    %v504 = vpop.f32.mrb[0].mxu0
    %v505 = vadd.f32 %v420, %v504
    %v506 = vpop.f32.mrb[0].mxu0
    %507 = vdwg.mxu0
    %v508 = vld [vmem:[#allocation2 + $0x8] sm:$0xff]
    %v509 = vld [vmem:[#allocation2 + $0x10] sm:$0xff]
    %v510 = vld [vmem:[#allocation2 + $0x20] sm:$0xff]
    %v511 = vld [vmem:[#allocation2 + $0x28] sm:$0xff]
    %s512 = scalar_lea.vmem [#allocation6], 256
    %v513 = vld [vmem:[%s512] sm:$0xff]
    %v514 = vld [vmem:[%s512 + $0x8] sm:$0xff]
    %v515 = vld [vmem:[%s512 + $0x10] sm:$0xff]
    %v516 = vld [vmem:[%s512 + $0x18] sm:$0xff]
    %v517 = vld [vmem:[%s512 + $0x20] sm:$0xff]
    %v518 = vld [vmem:[%s512 + $0x28] sm:$0xff]
    %v519 = vld [vmem:[%s512 + $0x30] sm:$0xff]
    %v520 = vld [vmem:[%s512 + $0x38] sm:$0xff]
    %v521 = vld [vmem:[%s512 + $0x40] sm:$0xff]
    %v522 = vld [vmem:[%s512 + $0x48] sm:$0xff]
    %v523 = vld [vmem:[%s512 + $0x50] sm:$0xff]
    %v524 = vld [vmem:[%s512 + $0x58] sm:$0xff]
    %v525 = vld [vmem:[%s512 + $0x60] sm:$0xff]
    %v526 = vld [vmem:[%s512 + $0x68] sm:$0xff]
    %v527 = vld [vmem:[%s512 + $0x70] sm:$0xff]
    %v528 = vld [vmem:[%s512 + $0x78] sm:$0xff]
    %529 = vmatprep.subr.mxu0 0.0
    %530 = vmatpush1.msra.mxu0 %v513
    %531 = vmatprep.subr.mxu0 0.0
    %532 = vmatpush1.msra.mxu0 %v514
    %533 = vmatprep.subr.mxu0 0.0
    %534 = vmatpush1.msra.mxu0 %v515
    %535 = vmatprep.subr.mxu0 0.0
    %536 = vmatpush1.msra.mxu0 %v516
    %537 = vmatprep.subr.mxu0 0.0
    %538 = vmatpush1.msra.mxu0 %v517
    %539 = vmatprep.subr.mxu0 0.0
    %540 = vmatpush1.msra.mxu0 %v518
    %541 = vmatprep.subr.mxu0 0.0
    %542 = vmatpush1.msra.mxu0 %v519
    %543 = vmatprep.subr.mxu0 0.0
    %544 = vmatpush1.msra.mxu0 %v520
    %545 = vmatprep.subr.mxu0 0.0
    %546 = vmatpush1.msra.mxu0 %v521
    %547 = vmatprep.subr.mxu0 0.0
    %548 = vmatpush1.msra.mxu0 %v522
    %549 = vmatprep.subr.mxu0 0.0
    %550 = vmatpush1.msra.mxu0 %v523
    %551 = vmatprep.subr.mxu0 0.0
    %552 = vmatpush1.msra.mxu0 %v524
    %553 = vmatprep.subr.mxu0 0.0
    %554 = vmatpush1.msra.mxu0 %v525
    %555 = vmatprep.subr.mxu0 0.0
    %556 = vmatpush1.msra.mxu0 %v526
    %557 = vmatprep.subr.mxu0 0.0
    %558 = vmatpush1.msra.mxu0 %v527
    %559 = vmatprep.subr.mxu0 0.0
    %560 = vmatpush1.msra.mxu0 %v528
    %561 = vmatprep.subr.mxu0 0.0
    %562 = vmatpush1.msra.mxu0 0.0
    %563 = vmatprep.subr.mxu0 0.0
    %564 = vmatpush1.msra.mxu0 0.0
    %565 = vmatprep.subr.mxu0 0.0
    %566 = vmatpush1.msra.mxu0 0.0
    %567 = vmatprep.subr.mxu0 0.0
    %568 = vmatpush1.msra.mxu0 0.0
    %569 = vmatprep.subr.mxu0 0.0
    %570 = vmatpush1.msra.mxu0 0.0
    %571 = vmatprep.subr.mxu0 0.0
    %572 = vmatpush1.msra.mxu0 0.0
    %573 = vmatprep.subr.mxu0 0.0
    %574 = vmatpush1.msra.mxu0 0.0
    %575 = vmatprep.subr.mxu0 0.0
    %576 = vmatpush1.msra.mxu0 0.0
    %577 = vmatprep.subr.mxu0 0.0
    %578 = vmatpush1.msra.mxu0 0.0
    %579 = vmatprep.subr.mxu0 0.0
    %580 = vmatpush1.msra.mxu0 0.0
    %581 = vmatprep.subr.mxu0 0.0
    %582 = vmatpush1.msra.mxu0 0.0
    %583 = vmatprep.subr.mxu0 0.0
    %584 = vmatpush1.msra.mxu0 0.0
    %585 = vmatprep.subr.mxu0 0.0
    %586 = vmatpush1.msra.mxu0 0.0
    %587 = vmatprep.subr.mxu0 0.0
    %588 = vmatpush1.msra.mxu0 0.0
    %589 = vmatprep.subr.mxu0 0.0
    %590 = vmatpush1.msra.mxu0 0.0
    %591 = vmatprep.subr.mxu0 0.0
    %592 = vmatpush1.msra.mxu0 0.0
    %593 = vmatprep.mubr.f32.mxu0 0.0
    %594 = vmatmul.mubr.f32.gmra.mrb[0].mxu0 %v508
    %v595 = vpop.f32.mrb[0].mxu0
    %v596 = vadd.f32 0.0, %v595
    %v597 = vpop.f32.mrb[0].mxu0
    %598 = vmatprep.mubr.f32.mxu0 0.0
    %599 = vmatmul.mubr.f32.gmra.mrb[0].mxu0 %v509
    %v600 = vpop.f32.mrb[0].mxu0
    %v601 = vadd.f32 0.0, %v600
    %v602 = vpop.f32.mrb[0].mxu0
    %603 = vmatprep.mubr.f32.mxu0 0.0
    %604 = vmatmul.mubr.f32.gmra.mrb[0].mxu0 %v510
    %v605 = vpop.f32.mrb[0].mxu0
    %v606 = vadd.f32 0.0, %v605
    %v607 = vpop.f32.mrb[0].mxu0
    %608 = vmatprep.mubr.f32.mxu0 0.0
    %609 = vmatmul.mubr.f32.gmra.mrb[0].mxu0 %v511
    %v610 = vpop.f32.mrb[0].mxu0
    %v611 = vadd.f32 0.0, %v610
    %v612 = vpop.f32.mrb[0].mxu0
    %613 = vdwg.mxu0
    %v614 = vadd.f32 %v490, %v596
    %v615 = vadd.f32 %v495, %v601
    %v616 = vadd.f32 %v500, %v606
    %v617 = vadd.f32 %v505, %v611
    %v618 = vld [vmem:[%s2] sm:$0x1]
    %v620 = vlaneseq
    %v621 = vshrl.u32 %v620, 7
    %v622 = vsub.s32 0, %v621
    %v623 = vrot.slane %v618, %v622
    %v625 = vadd.f32 %v614, %v623
    %v626 = vadd.f32 %v615, %v623
    %v627 = vadd.f32 %v616, %v623
    %v628 = vadd.f32 %v617, %v623
    %v629 = vmax.f32 %v625, 0.0
    %v630 = vmax.f32 %v626, 0.0
    %v631 = vmax.f32 %v627, 0.0
    %v632 = vmax.f32 %v628, 0.0
    %633 = vst [vmem:[#allocation2 + $0x8] sm:$0xff] %v629
    %634 = vst [vmem:[#allocation2 + $0x10] sm:$0xff] %v630
    %635 = vst [vmem:[#allocation2 + $0x20] sm:$0xff] %v631
    %636 = vst [vmem:[#allocation2 + $0x28] sm:$0xff] %v632
    %v637 = vld [vmem:[#allocation2 + $0x6] sm:$0xff]
    %v638 = vld [vmem:[#allocation2 + $0xe] sm:$0xff]
    %v639 = vld [vmem:[#allocation2 + $0x1e] sm:$0xff]
    %v640 = vld [vmem:[#allocation2 + $0x26] sm:$0xff]
    %v641 = vld [vmem:[#allocation8] sm:$0xff]
    %v642 = vld [vmem:[#allocation8 + $0x8] sm:$0xff]
    %v643 = vld [vmem:[#allocation8 + $0x10] sm:$0xff]
    %v644 = vld [vmem:[#allocation8 + $0x18] sm:$0xff]
    %v645 = vld [vmem:[#allocation8 + $0x20] sm:$0xff]
    %v646 = vld [vmem:[#allocation8 + $0x28] sm:$0xff]
    %v647 = vld [vmem:[#allocation8 + $0x30] sm:$0xff]
    %v648 = vld [vmem:[#allocation8 + $0x38] sm:$0xff]
    %v649 = vld [vmem:[#allocation8 + $0x40] sm:$0xff]
    %v650 = vld [vmem:[#allocation8 + $0x48] sm:$0xff]
    %v651 = vld [vmem:[#allocation8 + $0x50] sm:$0xff]
    %v652 = vld [vmem:[#allocation8 + $0x58] sm:$0xff]
    %v653 = vld [vmem:[#allocation8 + $0x60] sm:$0xff]
    %v654 = vld [vmem:[#allocation8 + $0x68] sm:$0xff]
    %v655 = vld [vmem:[#allocation8 + $0x70] sm:$0xff]
    %v656 = vld [vmem:[#allocation8 + $0x78] sm:$0xff]
    %v657 = vld [vmem:[#allocation2 + $0x7] sm:$0xff]
    %v658 = vld [vmem:[#allocation2 + $0xf] sm:$0xff]
    %v659 = vld [vmem:[#allocation2 + $0x1f] sm:$0xff]
    %v660 = vld [vmem:[#allocation2 + $0x27] sm:$0xff]
    %s661 = scalar_lea.vmem [#allocation8], 128
    %v662 = vld [vmem:[%s661] sm:$0xff]
    %v663 = vld [vmem:[%s661 + $0x8] sm:$0xff]
    %v664 = vld [vmem:[%s661 + $0x10] sm:$0xff]
    %v665 = vld [vmem:[%s661 + $0x18] sm:$0xff]
    %v666 = vld [vmem:[%s661 + $0x20] sm:$0xff]
    %v667 = vld [vmem:[%s661 + $0x28] sm:$0xff]
    %v668 = vld [vmem:[%s661 + $0x30] sm:$0xff]
    %v669 = vld [vmem:[%s661 + $0x38] sm:$0xff]
    %v670 = vld [vmem:[%s661 + $0x40] sm:$0xff]
    %v671 = vld [vmem:[%s661 + $0x48] sm:$0xff]
    %v672 = vld [vmem:[%s661 + $0x50] sm:$0xff]
    %v673 = vld [vmem:[%s661 + $0x58] sm:$0xff]
    %v674 = vld [vmem:[%s661 + $0x60] sm:$0xff]
    %v675 = vld [vmem:[%s661 + $0x68] sm:$0xff]
    %v676 = vld [vmem:[%s661 + $0x70] sm:$0xff]
    %v677 = vld [vmem:[%s661 + $0x78] sm:$0xff]
    %678 = vmatprep.subr.mxu0 0.0
    %679 = vmatpush1.msra.mxu0 %v662
    %680 = vmatprep.subr.mxu0 0.0
    %681 = vmatpush1.msra.mxu0 %v663
    %682 = vmatprep.subr.mxu0 0.0
    %683 = vmatpush1.msra.mxu0 %v664
    %684 = vmatprep.subr.mxu0 0.0
    %685 = vmatpush1.msra.mxu0 %v665
    %686 = vmatprep.subr.mxu0 0.0
    %687 = vmatpush1.msra.mxu0 %v666
    %688 = vmatprep.subr.mxu0 0.0
    %689 = vmatpush1.msra.mxu0 %v667
    %690 = vmatprep.subr.mxu0 0.0
    %691 = vmatpush1.msra.mxu0 %v668
    %692 = vmatprep.subr.mxu0 0.0
    %693 = vmatpush1.msra.mxu0 %v669
    %694 = vmatprep.subr.mxu0 0.0
    %695 = vmatpush1.msra.mxu0 %v670
    %696 = vmatprep.subr.mxu0 0.0
    %697 = vmatpush1.msra.mxu0 %v671
    %698 = vmatprep.subr.mxu0 0.0
    %699 = vmatpush1.msra.mxu0 %v672
    %700 = vmatprep.subr.mxu0 0.0
    %701 = vmatpush1.msra.mxu0 %v673
    %702 = vmatprep.subr.mxu0 0.0
    %703 = vmatpush1.msra.mxu0 %v674
    %704 = vmatprep.subr.mxu0 0.0
    %705 = vmatpush1.msra.mxu0 %v675
    %706 = vmatprep.subr.mxu0 0.0
    %707 = vmatpush1.msra.mxu0 %v676
    %708 = vmatprep.subr.mxu0 0.0
    %709 = vmatpush1.msra.mxu0 %v677
    %710 = vmatprep.subr.mxu0 0.0
    %711 = vmatpush1.msra.mxu0 0.0
    %712 = vmatprep.subr.mxu0 0.0
    %713 = vmatpush1.msra.mxu0 0.0
    %714 = vmatprep.subr.mxu0 0.0
    %715 = vmatpush1.msra.mxu0 0.0
    %716 = vmatprep.subr.mxu0 0.0
    %717 = vmatpush1.msra.mxu0 0.0
    %718 = vmatprep.subr.mxu0 0.0
    %719 = vmatpush1.msra.mxu0 0.0
    %720 = vmatprep.subr.mxu0 0.0
    %721 = vmatpush1.msra.mxu0 0.0
    %722 = vmatprep.subr.mxu0 0.0
    %723 = vmatpush1.msra.mxu0 0.0
    %724 = vmatprep.subr.mxu0 0.0
    %725 = vmatpush1.msra.mxu0 0.0
    %726 = vmatprep.subr.mxu0 0.0
    %727 = vmatpush1.msra.mxu0 0.0
    %728 = vmatprep.subr.mxu0 0.0
    %729 = vmatpush1.msra.mxu0 0.0
    %730 = vmatprep.subr.mxu0 0.0
    %731 = vmatpush1.msra.mxu0 0.0
    %732 = vmatprep.subr.mxu0 0.0
    %733 = vmatpush1.msra.mxu0 0.0
    %734 = vmatprep.subr.mxu0 0.0
    %735 = vmatpush1.msra.mxu0 0.0
    %736 = vmatprep.subr.mxu0 0.0
    %737 = vmatpush1.msra.mxu0 0.0
    %738 = vmatprep.subr.mxu0 0.0
    %739 = vmatpush1.msra.mxu0 0.0
    %740 = vmatprep.subr.mxu0 0.0
    %741 = vmatpush1.msra.mxu0 0.0
    %742 = vmatprep.mubr.f32.mxu0 0.0
    %743 = vmatmul.mubr.f32.gmra.mrb[0].mxu0 %v657
    %v744 = vpop.f32.mrb[0].mxu0
    %v745 = vadd.f32 0.0, %v744
    %v746 = vpop.f32.mrb[0].mxu0
    %747 = vmatprep.mubr.f32.mxu0 0.0
    %748 = vmatmul.mubr.f32.gmra.mrb[0].mxu0 %v658
    %v749 = vpop.f32.mrb[0].mxu0
    %v750 = vadd.f32 0.0, %v749
    %v751 = vpop.f32.mrb[0].mxu0
    %752 = vmatprep.mubr.f32.mxu0 0.0
    %753 = vmatmul.mubr.f32.gmra.mrb[0].mxu0 %v659
    %v754 = vpop.f32.mrb[0].mxu0
    %v755 = vadd.f32 0.0, %v754
    %v756 = vpop.f32.mrb[0].mxu0
    %757 = vmatprep.mubr.f32.mxu0 0.0
    %758 = vmatmul.mubr.f32.gmra.mrb[0].mxu0 %v660
    %v759 = vpop.f32.mrb[0].mxu0
    %v760 = vadd.f32 0.0, %v759
    %v761 = vpop.f32.mrb[0].mxu0
    %762 = vdwg.mxu0
    %763 = vmatprep.subr.mxu0 0.0
    %764 = vmatpush1.msra.mxu0 %v641
    %765 = vmatprep.subr.mxu0 0.0
    %766 = vmatpush1.msra.mxu0 %v642
    %767 = vmatprep.subr.mxu0 0.0
    %768 = vmatpush1.msra.mxu0 %v643
    %769 = vmatprep.subr.mxu0 0.0
    %770 = vmatpush1.msra.mxu0 %v644
    %771 = vmatprep.subr.mxu0 0.0
    %772 = vmatpush1.msra.mxu0 %v645
    %773 = vmatprep.subr.mxu0 0.0
    %774 = vmatpush1.msra.mxu0 %v646
    %775 = vmatprep.subr.mxu0 0.0
    %776 = vmatpush1.msra.mxu0 %v647
    %777 = vmatprep.subr.mxu0 0.0
    %778 = vmatpush1.msra.mxu0 %v648
    %779 = vmatprep.subr.mxu0 0.0
    %780 = vmatpush1.msra.mxu0 %v649
    %781 = vmatprep.subr.mxu0 0.0
    %782 = vmatpush1.msra.mxu0 %v650
    %783 = vmatprep.subr.mxu0 0.0
    %784 = vmatpush1.msra.mxu0 %v651
    %785 = vmatprep.subr.mxu0 0.0
    %786 = vmatpush1.msra.mxu0 %v652
    %787 = vmatprep.subr.mxu0 0.0
    %788 = vmatpush1.msra.mxu0 %v653
    %789 = vmatprep.subr.mxu0 0.0
    %790 = vmatpush1.msra.mxu0 %v654
    %791 = vmatprep.subr.mxu0 0.0
    %792 = vmatpush1.msra.mxu0 %v655
    %793 = vmatprep.subr.mxu0 0.0
    %794 = vmatpush1.msra.mxu0 %v656
    %795 = vmatprep.subr.mxu0 0.0
    %796 = vmatpush1.msra.mxu0 0.0
    %797 = vmatprep.subr.mxu0 0.0
    %798 = vmatpush1.msra.mxu0 0.0
    %799 = vmatprep.subr.mxu0 0.0
    %800 = vmatpush1.msra.mxu0 0.0
    %801 = vmatprep.subr.mxu0 0.0
    %802 = vmatpush1.msra.mxu0 0.0
    %803 = vmatprep.subr.mxu0 0.0
    %804 = vmatpush1.msra.mxu0 0.0
    %805 = vmatprep.subr.mxu0 0.0
    %806 = vmatpush1.msra.mxu0 0.0
    %807 = vmatprep.subr.mxu0 0.0
    %808 = vmatpush1.msra.mxu0 0.0
    %809 = vmatprep.subr.mxu0 0.0
    %810 = vmatpush1.msra.mxu0 0.0
    %811 = vmatprep.subr.mxu0 0.0
    %812 = vmatpush1.msra.mxu0 0.0
    %813 = vmatprep.subr.mxu0 0.0
    %814 = vmatpush1.msra.mxu0 0.0
    %815 = vmatprep.subr.mxu0 0.0
    %816 = vmatpush1.msra.mxu0 0.0
    %817 = vmatprep.subr.mxu0 0.0
    %818 = vmatpush1.msra.mxu0 0.0
    %819 = vmatprep.subr.mxu0 0.0
    %820 = vmatpush1.msra.mxu0 0.0
    %821 = vmatprep.subr.mxu0 0.0
    %822 = vmatpush1.msra.mxu0 0.0
    %823 = vmatprep.subr.mxu0 0.0
    %824 = vmatpush1.msra.mxu0 0.0
    %825 = vmatprep.subr.mxu0 0.0
    %826 = vmatpush1.msra.mxu0 0.0
    %827 = vmatprep.mubr.f32.mxu0 0.0
    %828 = vmatmul.mubr.f32.gmra.mrb[0].mxu0 %v637
    %v829 = vpop.f32.mrb[0].mxu0
    %v830 = vadd.f32 %v745, %v829
    %v831 = vpop.f32.mrb[0].mxu0
    %832 = vmatprep.mubr.f32.mxu0 0.0
    %833 = vmatmul.mubr.f32.gmra.mrb[0].mxu0 %v638
    %v834 = vpop.f32.mrb[0].mxu0
    %v835 = vadd.f32 %v750, %v834
    %v836 = vpop.f32.mrb[0].mxu0
    %837 = vmatprep.mubr.f32.mxu0 0.0
    %838 = vmatmul.mubr.f32.gmra.mrb[0].mxu0 %v639
    %v839 = vpop.f32.mrb[0].mxu0
    %v840 = vadd.f32 %v755, %v839
    %v841 = vpop.f32.mrb[0].mxu0
    %842 = vmatprep.mubr.f32.mxu0 0.0
    %843 = vmatmul.mubr.f32.gmra.mrb[0].mxu0 %v640
    %v844 = vpop.f32.mrb[0].mxu0
    %v845 = vadd.f32 %v760, %v844
    %v846 = vpop.f32.mrb[0].mxu0
    %847 = vdwg.mxu0
    %v848 = vld [vmem:[#allocation2 + $0x8] sm:$0xff]
    %v849 = vld [vmem:[#allocation2 + $0x10] sm:$0xff]
    %v850 = vld [vmem:[#allocation2 + $0x20] sm:$0xff]
    %v851 = vld [vmem:[#allocation2 + $0x28] sm:$0xff]
    %s852 = scalar_lea.vmem [#allocation8], 256
    %v853 = vld [vmem:[%s852] sm:$0xff]
    %v854 = vld [vmem:[%s852 + $0x8] sm:$0xff]
    %v855 = vld [vmem:[%s852 + $0x10] sm:$0xff]
    %v856 = vld [vmem:[%s852 + $0x18] sm:$0xff]
    %v857 = vld [vmem:[%s852 + $0x20] sm:$0xff]
    %v858 = vld [vmem:[%s852 + $0x28] sm:$0xff]
    %v859 = vld [vmem:[%s852 + $0x30] sm:$0xff]
    %v860 = vld [vmem:[%s852 + $0x38] sm:$0xff]
    %v861 = vld [vmem:[%s852 + $0x40] sm:$0xff]
    %v862 = vld [vmem:[%s852 + $0x48] sm:$0xff]
    %v863 = vld [vmem:[%s852 + $0x50] sm:$0xff]
    %v864 = vld [vmem:[%s852 + $0x58] sm:$0xff]
    %v865 = vld [vmem:[%s852 + $0x60] sm:$0xff]
    %v866 = vld [vmem:[%s852 + $0x68] sm:$0xff]
    %v867 = vld [vmem:[%s852 + $0x70] sm:$0xff]
    %v868 = vld [vmem:[%s852 + $0x78] sm:$0xff]
    %869 = vmatprep.subr.mxu0 0.0
    %870 = vmatpush1.msra.mxu0 %v853
    %871 = vmatprep.subr.mxu0 0.0
    %872 = vmatpush1.msra.mxu0 %v854
    %873 = vmatprep.subr.mxu0 0.0
    %874 = vmatpush1.msra.mxu0 %v855
    %875 = vmatprep.subr.mxu0 0.0
    %876 = vmatpush1.msra.mxu0 %v856
    %877 = vmatprep.subr.mxu0 0.0
    %878 = vmatpush1.msra.mxu0 %v857
    %879 = vmatprep.subr.mxu0 0.0
    %880 = vmatpush1.msra.mxu0 %v858
    %881 = vmatprep.subr.mxu0 0.0
    %882 = vmatpush1.msra.mxu0 %v859
    %883 = vmatprep.subr.mxu0 0.0
    %884 = vmatpush1.msra.mxu0 %v860
    %885 = vmatprep.subr.mxu0 0.0
    %886 = vmatpush1.msra.mxu0 %v861
    %887 = vmatprep.subr.mxu0 0.0
    %888 = vmatpush1.msra.mxu0 %v862
    %889 = vmatprep.subr.mxu0 0.0
    %890 = vmatpush1.msra.mxu0 %v863
    %891 = vmatprep.subr.mxu0 0.0
    %892 = vmatpush1.msra.mxu0 %v864
    %893 = vmatprep.subr.mxu0 0.0
    %894 = vmatpush1.msra.mxu0 %v865
    %895 = vmatprep.subr.mxu0 0.0
    %896 = vmatpush1.msra.mxu0 %v866
    %897 = vmatprep.subr.mxu0 0.0
    %898 = vmatpush1.msra.mxu0 %v867
    %899 = vmatprep.subr.mxu0 0.0
    %900 = vmatpush1.msra.mxu0 %v868
    %901 = vmatprep.subr.mxu0 0.0
    %902 = vmatpush1.msra.mxu0 0.0
    %903 = vmatprep.subr.mxu0 0.0
    %904 = vmatpush1.msra.mxu0 0.0
    %905 = vmatprep.subr.mxu0 0.0
    %906 = vmatpush1.msra.mxu0 0.0
    %907 = vmatprep.subr.mxu0 0.0
    %908 = vmatpush1.msra.mxu0 0.0
    %909 = vmatprep.subr.mxu0 0.0
    %910 = vmatpush1.msra.mxu0 0.0
    %911 = vmatprep.subr.mxu0 0.0
    %912 = vmatpush1.msra.mxu0 0.0
    %913 = vmatprep.subr.mxu0 0.0
    %914 = vmatpush1.msra.mxu0 0.0
    %915 = vmatprep.subr.mxu0 0.0
    %916 = vmatpush1.msra.mxu0 0.0
    %917 = vmatprep.subr.mxu0 0.0
    %918 = vmatpush1.msra.mxu0 0.0
    %919 = vmatprep.subr.mxu0 0.0
    %920 = vmatpush1.msra.mxu0 0.0
    %921 = vmatprep.subr.mxu0 0.0
    %922 = vmatpush1.msra.mxu0 0.0
    %923 = vmatprep.subr.mxu0 0.0
    %924 = vmatpush1.msra.mxu0 0.0
    %925 = vmatprep.subr.mxu0 0.0
    %926 = vmatpush1.msra.mxu0 0.0
    %927 = vmatprep.subr.mxu0 0.0
    %928 = vmatpush1.msra.mxu0 0.0
    %929 = vmatprep.subr.mxu0 0.0
    %930 = vmatpush1.msra.mxu0 0.0
    %931 = vmatprep.subr.mxu0 0.0
    %932 = vmatpush1.msra.mxu0 0.0
    %933 = vmatprep.mubr.f32.mxu0 0.0
    %934 = vmatmul.mubr.f32.gmra.mrb[0].mxu0 %v848
    %v935 = vpop.f32.mrb[0].mxu0
    %v936 = vadd.f32 0.0, %v935
    %v937 = vpop.f32.mrb[0].mxu0
    %938 = vmatprep.mubr.f32.mxu0 0.0
    %939 = vmatmul.mubr.f32.gmra.mrb[0].mxu0 %v849
    %v940 = vpop.f32.mrb[0].mxu0
    %v941 = vadd.f32 0.0, %v940
    %v942 = vpop.f32.mrb[0].mxu0
    %943 = vmatprep.mubr.f32.mxu0 0.0
    %944 = vmatmul.mubr.f32.gmra.mrb[0].mxu0 %v850
    %v945 = vpop.f32.mrb[0].mxu0
    %v946 = vadd.f32 0.0, %v945
    %v947 = vpop.f32.mrb[0].mxu0
    %948 = vmatprep.mubr.f32.mxu0 0.0
    %949 = vmatmul.mubr.f32.gmra.mrb[0].mxu0 %v851
    %v950 = vpop.f32.mrb[0].mxu0
    %v951 = vadd.f32 0.0, %v950
    %v952 = vpop.f32.mrb[0].mxu0
    %953 = vdwg.mxu0
    %v954 = vadd.f32 %v830, %v936
    %v955 = vadd.f32 %v835, %v941
    %v956 = vadd.f32 %v840, %v946
    %v957 = vadd.f32 %v845, %v951
    %v958 = vld [vmem:[%s4] sm:$0x1]
    %v960 = vlaneseq
    %v961 = vshrl.u32 %v960, 7
    %v962 = vsub.s32 0, %v961
    %v963 = vrot.slane %v958, %v962
    %v965 = vadd.f32 %v954, %v963
    %v966 = vadd.f32 %v955, %v963
    %v967 = vadd.f32 %v956, %v963
    %v968 = vadd.f32 %v957, %v963
    %v969 = vmax.f32 %v965, 0.0
    %v970 = vmax.f32 %v966, 0.0
    %v971 = vmax.f32 %v967, 0.0
    %v972 = vmax.f32 %v968, 0.0
    %v973 = vadd.f32 %v969, %v275
    %v974 = vadd.f32 %v970, %v280
    %v975 = vadd.f32 %v971, %v285
    %v976 = vadd.f32 %v972, %v290
    %v977 = vmax.f32 %v973, 0.0
    %v978 = vmax.f32 %v974, 0.0
    %v979 = vmax.f32 %v975, 0.0
    %v980 = vmax.f32 %v976, 0.0
    %981 = vst [vmem:[#allocation2 + $0x8] sm:$0xff] %v977
    %982 = vst [vmem:[#allocation2 + $0x10] sm:$0xff] %v978
    %983 = vst [vmem:[#allocation2 + $0x20] sm:$0xff] %v979
    %984 = vst [vmem:[#allocation2 + $0x28] sm:$0xff] %v980
    %v985 = vld [vmem:[#allocation2 + $0x4] sm:$0xff]
    %v986 = vld [vmem:[#allocation2 + $0xc] sm:$0xff]
    %v987 = vld [vmem:[#allocation2 + $0x1c] sm:$0xff]
    %v988 = vld [vmem:[#allocation2 + $0x24] sm:$0xff]
    %v989 = vld [vmem:[#allocation11] sm:$0xff]
    %v990 = vld [vmem:[#allocation11 + $0x8] sm:$0xff]
    %v991 = vld [vmem:[#allocation11 + $0x10] sm:$0xff]
    %v992 = vld [vmem:[#allocation11 + $0x18] sm:$0xff]
    %v993 = vld [vmem:[#allocation11 + $0x20] sm:$0xff]
    %v994 = vld [vmem:[#allocation11 + $0x28] sm:$0xff]
    %v995 = vld [vmem:[#allocation11 + $0x30] sm:$0xff]
    %v996 = vld [vmem:[#allocation11 + $0x38] sm:$0xff]
    %v997 = vld [vmem:[#allocation11 + $0x40] sm:$0xff]
    %v998 = vld [vmem:[#allocation11 + $0x48] sm:$0xff]
    %v999 = vld [vmem:[#allocation11 + $0x50] sm:$0xff]
    %v1000 = vld [vmem:[#allocation11 + $0x58] sm:$0xff]
    %v1001 = vld [vmem:[#allocation11 + $0x60] sm:$0xff]
    %v1002 = vld [vmem:[#allocation11 + $0x68] sm:$0xff]
    %v1003 = vld [vmem:[#allocation11 + $0x70] sm:$0xff]
    %v1004 = vld [vmem:[#allocation11 + $0x78] sm:$0xff]
    %v1005 = vld [vmem:[#allocation2 + $0x6] sm:$0xff]
    %v1006 = vld [vmem:[#allocation2 + $0xe] sm:$0xff]
    %v1007 = vld [vmem:[#allocation2 + $0x1e] sm:$0xff]
    %v1008 = vld [vmem:[#allocation2 + $0x26] sm:$0xff]
    %s1009 = scalar_lea.vmem [#allocation11], 128
    %v1010 = vld [vmem:[%s1009] sm:$0xff]
    %v1011 = vld [vmem:[%s1009 + $0x8] sm:$0xff]
    %v1012 = vld [vmem:[%s1009 + $0x10] sm:$0xff]
    %v1013 = vld [vmem:[%s1009 + $0x18] sm:$0xff]
    %v1014 = vld [vmem:[%s1009 + $0x20] sm:$0xff]
    %v1015 = vld [vmem:[%s1009 + $0x28] sm:$0xff]
    %v1016 = vld [vmem:[%s1009 + $0x30] sm:$0xff]
    %v1017 = vld [vmem:[%s1009 + $0x38] sm:$0xff]
    %v1018 = vld [vmem:[%s1009 + $0x40] sm:$0xff]
    %v1019 = vld [vmem:[%s1009 + $0x48] sm:$0xff]
    %v1020 = vld [vmem:[%s1009 + $0x50] sm:$0xff]
    %v1021 = vld [vmem:[%s1009 + $0x58] sm:$0xff]
    %v1022 = vld [vmem:[%s1009 + $0x60] sm:$0xff]
    %v1023 = vld [vmem:[%s1009 + $0x68] sm:$0xff]
    %v1024 = vld [vmem:[%s1009 + $0x70] sm:$0xff]
    %v1025 = vld [vmem:[%s1009 + $0x78] sm:$0xff]
    %1026 = vmatprep.subr.mxu0 0.0
    %1027 = vmatpush1.msra.mxu0 %v1010
    %1028 = vmatprep.subr.mxu0 0.0
    %1029 = vmatpush1.msra.mxu0 %v1011
    %1030 = vmatprep.subr.mxu0 0.0
    %1031 = vmatpush1.msra.mxu0 %v1012
    %1032 = vmatprep.subr.mxu0 0.0
    %1033 = vmatpush1.msra.mxu0 %v1013
    %1034 = vmatprep.subr.mxu0 0.0
    %1035 = vmatpush1.msra.mxu0 %v1014
    %1036 = vmatprep.subr.mxu0 0.0
    %1037 = vmatpush1.msra.mxu0 %v1015
    %1038 = vmatprep.subr.mxu0 0.0
    %1039 = vmatpush1.msra.mxu0 %v1016
    %1040 = vmatprep.subr.mxu0 0.0
    %1041 = vmatpush1.msra.mxu0 %v1017
    %1042 = vmatprep.subr.mxu0 0.0
    %1043 = vmatpush1.msra.mxu0 %v1018
    %1044 = vmatprep.subr.mxu0 0.0
    %1045 = vmatpush1.msra.mxu0 %v1019
    %1046 = vmatprep.subr.mxu0 0.0
    %1047 = vmatpush1.msra.mxu0 %v1020
    %1048 = vmatprep.subr.mxu0 0.0
    %1049 = vmatpush1.msra.mxu0 %v1021
    %1050 = vmatprep.subr.mxu0 0.0
    %1051 = vmatpush1.msra.mxu0 %v1022
    %1052 = vmatprep.subr.mxu0 0.0
    %1053 = vmatpush1.msra.mxu0 %v1023
    %1054 = vmatprep.subr.mxu0 0.0
    %1055 = vmatpush1.msra.mxu0 %v1024
    %1056 = vmatprep.subr.mxu0 0.0
    %1057 = vmatpush1.msra.mxu0 %v1025
    %1058 = vmatprep.subr.mxu0 0.0
    %1059 = vmatpush1.msra.mxu0 0.0
    %1060 = vmatprep.subr.mxu0 0.0
    %1061 = vmatpush1.msra.mxu0 0.0
    %1062 = vmatprep.subr.mxu0 0.0
    %1063 = vmatpush1.msra.mxu0 0.0
    %1064 = vmatprep.subr.mxu0 0.0
    %1065 = vmatpush1.msra.mxu0 0.0
    %1066 = vmatprep.subr.mxu0 0.0
    %1067 = vmatpush1.msra.mxu0 0.0
    %1068 = vmatprep.subr.mxu0 0.0
    %1069 = vmatpush1.msra.mxu0 0.0
    %1070 = vmatprep.subr.mxu0 0.0
    %1071 = vmatpush1.msra.mxu0 0.0
    %1072 = vmatprep.subr.mxu0 0.0
    %1073 = vmatpush1.msra.mxu0 0.0
    %1074 = vmatprep.subr.mxu0 0.0
    %1075 = vmatpush1.msra.mxu0 0.0
    %1076 = vmatprep.subr.mxu0 0.0
    %1077 = vmatpush1.msra.mxu0 0.0
    %1078 = vmatprep.subr.mxu0 0.0
    %1079 = vmatpush1.msra.mxu0 0.0
    %1080 = vmatprep.subr.mxu0 0.0
    %1081 = vmatpush1.msra.mxu0 0.0
    %1082 = vmatprep.subr.mxu0 0.0
    %1083 = vmatpush1.msra.mxu0 0.0
    %1084 = vmatprep.subr.mxu0 0.0
    %1085 = vmatpush1.msra.mxu0 0.0
    %1086 = vmatprep.subr.mxu0 0.0
    %1087 = vmatpush1.msra.mxu0 0.0
    %1088 = vmatprep.subr.mxu0 0.0
    %1089 = vmatpush1.msra.mxu0 0.0
    %1090 = vmatprep.mubr.f32.mxu0 0.0
    %1091 = vmatmul.mubr.f32.gmra.mrb[0].mxu0 %v1005
    %v1092 = vpop.f32.mrb[0].mxu0
    %v1093 = vadd.f32 0.0, %v1092
    %v1094 = vpop.f32.mrb[0].mxu0
    %1095 = vmatprep.mubr.f32.mxu0 0.0
    %1096 = vmatmul.mubr.f32.gmra.mrb[0].mxu0 %v1006
    %v1097 = vpop.f32.mrb[0].mxu0
    %v1098 = vadd.f32 0.0, %v1097
    %v1099 = vpop.f32.mrb[0].mxu0
    %1100 = vmatprep.mubr.f32.mxu0 0.0
    %1101 = vmatmul.mubr.f32.gmra.mrb[0].mxu0 %v1007
    %v1102 = vpop.f32.mrb[0].mxu0
    %v1103 = vadd.f32 0.0, %v1102
    %v1104 = vpop.f32.mrb[0].mxu0
    %1105 = vmatprep.mubr.f32.mxu0 0.0
    %1106 = vmatmul.mubr.f32.gmra.mrb[0].mxu0 %v1008
    %v1107 = vpop.f32.mrb[0].mxu0
    %v1108 = vadd.f32 0.0, %v1107
    %v1109 = vpop.f32.mrb[0].mxu0
    %1110 = vdwg.mxu0
    %1111 = vmatprep.subr.mxu0 0.0
    %1112 = vmatpush1.msra.mxu0 %v989
    %1113 = vmatprep.subr.mxu0 0.0
    %1114 = vmatpush1.msra.mxu0 %v990
    %1115 = vmatprep.subr.mxu0 0.0
    %1116 = vmatpush1.msra.mxu0 %v991
    %1117 = vmatprep.subr.mxu0 0.0
    %1118 = vmatpush1.msra.mxu0 %v992
    %1119 = vmatprep.subr.mxu0 0.0
    %1120 = vmatpush1.msra.mxu0 %v993
    %1121 = vmatprep.subr.mxu0 0.0
    %1122 = vmatpush1.msra.mxu0 %v994
    %1123 = vmatprep.subr.mxu0 0.0
    %1124 = vmatpush1.msra.mxu0 %v995
    %1125 = vmatprep.subr.mxu0 0.0
    %1126 = vmatpush1.msra.mxu0 %v996
    %1127 = vmatprep.subr.mxu0 0.0
    %1128 = vmatpush1.msra.mxu0 %v997
    %1129 = vmatprep.subr.mxu0 0.0
    %1130 = vmatpush1.msra.mxu0 %v998
    %1131 = vmatprep.subr.mxu0 0.0
    %1132 = vmatpush1.msra.mxu0 %v999
    %1133 = vmatprep.subr.mxu0 0.0
    %1134 = vmatpush1.msra.mxu0 %v1000
    %1135 = vmatprep.subr.mxu0 0.0
    %1136 = vmatpush1.msra.mxu0 %v1001
    %1137 = vmatprep.subr.mxu0 0.0
    %1138 = vmatpush1.msra.mxu0 %v1002
    %1139 = vmatprep.subr.mxu0 0.0
    %1140 = vmatpush1.msra.mxu0 %v1003
    %1141 = vmatprep.subr.mxu0 0.0
    %1142 = vmatpush1.msra.mxu0 %v1004
    %1143 = vmatprep.subr.mxu0 0.0
    %1144 = vmatpush1.msra.mxu0 0.0
    %1145 = vmatprep.subr.mxu0 0.0
    %1146 = vmatpush1.msra.mxu0 0.0
    %1147 = vmatprep.subr.mxu0 0.0
    %1148 = vmatpush1.msra.mxu0 0.0
    %1149 = vmatprep.subr.mxu0 0.0
    %1150 = vmatpush1.msra.mxu0 0.0
    %1151 = vmatprep.subr.mxu0 0.0
    %1152 = vmatpush1.msra.mxu0 0.0
    %1153 = vmatprep.subr.mxu0 0.0
    %1154 = vmatpush1.msra.mxu0 0.0
    %1155 = vmatprep.subr.mxu0 0.0
    %1156 = vmatpush1.msra.mxu0 0.0
    %1157 = vmatprep.subr.mxu0 0.0
    %1158 = vmatpush1.msra.mxu0 0.0
    %1159 = vmatprep.subr.mxu0 0.0
    %1160 = vmatpush1.msra.mxu0 0.0
    %1161 = vmatprep.subr.mxu0 0.0
    %1162 = vmatpush1.msra.mxu0 0.0
    %1163 = vmatprep.subr.mxu0 0.0
    %1164 = vmatpush1.msra.mxu0 0.0
    %1165 = vmatprep.subr.mxu0 0.0
    %1166 = vmatpush1.msra.mxu0 0.0
    %1167 = vmatprep.subr.mxu0 0.0
    %1168 = vmatpush1.msra.mxu0 0.0
    %1169 = vmatprep.subr.mxu0 0.0
    %1170 = vmatpush1.msra.mxu0 0.0
    %1171 = vmatprep.subr.mxu0 0.0
    %1172 = vmatpush1.msra.mxu0 0.0
    %1173 = vmatprep.subr.mxu0 0.0
    %1174 = vmatpush1.msra.mxu0 0.0
    %1175 = vmatprep.mubr.f32.mxu0 0.0
    %1176 = vmatmul.mubr.f32.gmra.mrb[0].mxu0 %v985
    %v1177 = vpop.f32.mrb[0].mxu0
    %v1178 = vadd.f32 %v1093, %v1177
    %v1179 = vpop.f32.mrb[0].mxu0
    %1180 = vmatprep.mubr.f32.mxu0 0.0
    %1181 = vmatmul.mubr.f32.gmra.mrb[0].mxu0 %v986
    %v1182 = vpop.f32.mrb[0].mxu0
    %v1183 = vadd.f32 %v1098, %v1182
    %v1184 = vpop.f32.mrb[0].mxu0
    %1185 = vmatprep.mubr.f32.mxu0 0.0
    %1186 = vmatmul.mubr.f32.gmra.mrb[0].mxu0 %v987
    %v1187 = vpop.f32.mrb[0].mxu0
    %v1188 = vadd.f32 %v1103, %v1187
    %v1189 = vpop.f32.mrb[0].mxu0
    %1190 = vmatprep.mubr.f32.mxu0 0.0
    %1191 = vmatmul.mubr.f32.gmra.mrb[0].mxu0 %v988
    %v1192 = vpop.f32.mrb[0].mxu0
    %v1193 = vadd.f32 %v1108, %v1192
    %v1194 = vpop.f32.mrb[0].mxu0
    %1195 = vdwg.mxu0
    %v1196 = vld [vmem:[#allocation2 + $0x8] sm:$0xff]
    %v1197 = vld [vmem:[#allocation2 + $0x10] sm:$0xff]
    %v1198 = vld [vmem:[#allocation2 + $0x20] sm:$0xff]
    %v1199 = vld [vmem:[#allocation2 + $0x28] sm:$0xff]
    %s1200 = scalar_lea.vmem [#allocation11], 256
    %v1201 = vld [vmem:[%s1200] sm:$0xff]
    %v1202 = vld [vmem:[%s1200 + $0x8] sm:$0xff]
    %v1203 = vld [vmem:[%s1200 + $0x10] sm:$0xff]
    %v1204 = vld [vmem:[%s1200 + $0x18] sm:$0xff]
    %v1205 = vld [vmem:[%s1200 + $0x20] sm:$0xff]
    %v1206 = vld [vmem:[%s1200 + $0x28] sm:$0xff]
    %v1207 = vld [vmem:[%s1200 + $0x30] sm:$0xff]
    %v1208 = vld [vmem:[%s1200 + $0x38] sm:$0xff]
    %v1209 = vld [vmem:[%s1200 + $0x40] sm:$0xff]
    %v1210 = vld [vmem:[%s1200 + $0x48] sm:$0xff]
    %v1211 = vld [vmem:[%s1200 + $0x50] sm:$0xff]
    %v1212 = vld [vmem:[%s1200 + $0x58] sm:$0xff]
    %v1213 = vld [vmem:[%s1200 + $0x60] sm:$0xff]
    %v1214 = vld [vmem:[%s1200 + $0x68] sm:$0xff]
    %v1215 = vld [vmem:[%s1200 + $0x70] sm:$0xff]
    %v1216 = vld [vmem:[%s1200 + $0x78] sm:$0xff]
    %1217 = vmatprep.subr.mxu0 0.0
    %1218 = vmatpush1.msra.mxu0 %v1201
    %1219 = vmatprep.subr.mxu0 0.0
    %1220 = vmatpush1.msra.mxu0 %v1202
    %1221 = vmatprep.subr.mxu0 0.0
    %1222 = vmatpush1.msra.mxu0 %v1203
    %1223 = vmatprep.subr.mxu0 0.0
    %1224 = vmatpush1.msra.mxu0 %v1204
    %1225 = vmatprep.subr.mxu0 0.0
    %1226 = vmatpush1.msra.mxu0 %v1205
    %1227 = vmatprep.subr.mxu0 0.0
    %1228 = vmatpush1.msra.mxu0 %v1206
    %1229 = vmatprep.subr.mxu0 0.0
    %1230 = vmatpush1.msra.mxu0 %v1207
    %1231 = vmatprep.subr.mxu0 0.0
    %1232 = vmatpush1.msra.mxu0 %v1208
    %1233 = vmatprep.subr.mxu0 0.0
    %1234 = vmatpush1.msra.mxu0 %v1209
    %1235 = vmatprep.subr.mxu0 0.0
    %1236 = vmatpush1.msra.mxu0 %v1210
    %1237 = vmatprep.subr.mxu0 0.0
    %1238 = vmatpush1.msra.mxu0 %v1211
    %1239 = vmatprep.subr.mxu0 0.0
    %1240 = vmatpush1.msra.mxu0 %v1212
    %1241 = vmatprep.subr.mxu0 0.0
    %1242 = vmatpush1.msra.mxu0 %v1213
    %1243 = vmatprep.subr.mxu0 0.0
    %1244 = vmatpush1.msra.mxu0 %v1214
    %1245 = vmatprep.subr.mxu0 0.0
    %1246 = vmatpush1.msra.mxu0 %v1215
    %1247 = vmatprep.subr.mxu0 0.0
    %1248 = vmatpush1.msra.mxu0 %v1216
    %1249 = vmatprep.subr.mxu0 0.0
    %1250 = vmatpush1.msra.mxu0 0.0
    %1251 = vmatprep.subr.mxu0 0.0
    %1252 = vmatpush1.msra.mxu0 0.0
    %1253 = vmatprep.subr.mxu0 0.0
    %1254 = vmatpush1.msra.mxu0 0.0
    %1255 = vmatprep.subr.mxu0 0.0
    %1256 = vmatpush1.msra.mxu0 0.0
    %1257 = vmatprep.subr.mxu0 0.0
    %1258 = vmatpush1.msra.mxu0 0.0
    %1259 = vmatprep.subr.mxu0 0.0
    %1260 = vmatpush1.msra.mxu0 0.0
    %1261 = vmatprep.subr.mxu0 0.0
    %1262 = vmatpush1.msra.mxu0 0.0
    %1263 = vmatprep.subr.mxu0 0.0
    %1264 = vmatpush1.msra.mxu0 0.0
    %1265 = vmatprep.subr.mxu0 0.0
    %1266 = vmatpush1.msra.mxu0 0.0
    %1267 = vmatprep.subr.mxu0 0.0
    %1268 = vmatpush1.msra.mxu0 0.0
    %1269 = vmatprep.subr.mxu0 0.0
    %1270 = vmatpush1.msra.mxu0 0.0
    %1271 = vmatprep.subr.mxu0 0.0
    %1272 = vmatpush1.msra.mxu0 0.0
    %1273 = vmatprep.subr.mxu0 0.0
    %1274 = vmatpush1.msra.mxu0 0.0
    %1275 = vmatprep.subr.mxu0 0.0
    %1276 = vmatpush1.msra.mxu0 0.0
    %1277 = vmatprep.subr.mxu0 0.0
    %1278 = vmatpush1.msra.mxu0 0.0
    %1279 = vmatprep.subr.mxu0 0.0
    %1280 = vmatpush1.msra.mxu0 0.0
    %1281 = vmatprep.mubr.f32.mxu0 0.0
    %1282 = vmatmul.mubr.f32.gmra.mrb[0].mxu0 %v1196
    %v1283 = vpop.f32.mrb[0].mxu0
    %v1284 = vadd.f32 0.0, %v1283
    %v1285 = vpop.f32.mrb[0].mxu0
    %1286 = vmatprep.mubr.f32.mxu0 0.0
    %1287 = vmatmul.mubr.f32.gmra.mrb[0].mxu0 %v1197
    %v1288 = vpop.f32.mrb[0].mxu0
    %v1289 = vadd.f32 0.0, %v1288
    %v1290 = vpop.f32.mrb[0].mxu0
    %1291 = vmatprep.mubr.f32.mxu0 0.0
    %1292 = vmatmul.mubr.f32.gmra.mrb[0].mxu0 %v1198
    %v1293 = vpop.f32.mrb[0].mxu0
    %v1294 = vadd.f32 0.0, %v1293
    %v1295 = vpop.f32.mrb[0].mxu0
    %1296 = vmatprep.mubr.f32.mxu0 0.0
    %1297 = vmatmul.mubr.f32.gmra.mrb[0].mxu0 %v1199
    %v1298 = vpop.f32.mrb[0].mxu0
    %v1299 = vadd.f32 0.0, %v1298
    %v1300 = vpop.f32.mrb[0].mxu0
    %1301 = vdwg.mxu0
    %v1302 = vadd.f32 %v1178, %v1284
    %v1303 = vadd.f32 %v1183, %v1289
    %v1304 = vadd.f32 %v1188, %v1294
    %v1305 = vadd.f32 %v1193, %v1299
    %v1306 = vld [vmem:[%s8] sm:$0x1]
    %v1308 = vlaneseq
    %v1309 = vshrl.u32 %v1308, 7
    %v1310 = vsub.s32 0, %v1309
    %v1311 = vrot.slane %v1306, %v1310
    %v1313 = vadd.f32 %v1302, %v1311
    %v1314 = vadd.f32 %v1303, %v1311
    %v1315 = vadd.f32 %v1304, %v1311
    %v1316 = vadd.f32 %v1305, %v1311
    %v1317 = vmax.f32 %v1313, 0.0
    %v1318 = vmax.f32 %v1314, 0.0
    %v1319 = vmax.f32 %v1315, 0.0
    %v1320 = vmax.f32 %v1316, 0.0
    %1321 = vst [vmem:[#allocation2 + $0x8] sm:$0xff] %v1317
    %1322 = vst [vmem:[#allocation2 + $0x10] sm:$0xff] %v1318
    %1323 = vst [vmem:[#allocation2 + $0x20] sm:$0xff] %v1319
    %1324 = vst [vmem:[#allocation2 + $0x28] sm:$0xff] %v1320
    %v1325 = vld [vmem:[#allocation2 + $0x4] sm:$0xff]
    %v1326 = vld [vmem:[#allocation2 + $0xc] sm:$0xff]
    %v1327 = vld [vmem:[#allocation2 + $0x1c] sm:$0xff]
    %v1328 = vld [vmem:[#allocation2 + $0x24] sm:$0xff]
    %v1329 = vld [vmem:[#allocation12] sm:$0xff]
    %v1330 = vld [vmem:[#allocation12 + $0x8] sm:$0xff]
    %v1331 = vld [vmem:[#allocation12 + $0x10] sm:$0xff]
    %v1332 = vld [vmem:[#allocation12 + $0x18] sm:$0xff]
    %v1333 = vld [vmem:[#allocation12 + $0x20] sm:$0xff]
    %v1334 = vld [vmem:[#allocation12 + $0x28] sm:$0xff]
    %v1335 = vld [vmem:[#allocation12 + $0x30] sm:$0xff]
    %v1336 = vld [vmem:[#allocation12 + $0x38] sm:$0xff]
    %v1337 = vld [vmem:[#allocation12 + $0x40] sm:$0xff]
    %v1338 = vld [vmem:[#allocation12 + $0x48] sm:$0xff]
    %v1339 = vld [vmem:[#allocation12 + $0x50] sm:$0xff]
    %v1340 = vld [vmem:[#allocation12 + $0x58] sm:$0xff]
    %v1341 = vld [vmem:[#allocation12 + $0x60] sm:$0xff]
    %v1342 = vld [vmem:[#allocation12 + $0x68] sm:$0xff]
    %v1343 = vld [vmem:[#allocation12 + $0x70] sm:$0xff]
    %v1344 = vld [vmem:[#allocation12 + $0x78] sm:$0xff]
    %v1345 = vld [vmem:[#allocation2 + $0x6] sm:$0xff]
    %v1346 = vld [vmem:[#allocation2 + $0xe] sm:$0xff]
    %v1347 = vld [vmem:[#allocation2 + $0x1e] sm:$0xff]
    %v1348 = vld [vmem:[#allocation2 + $0x26] sm:$0xff]
    %s1349 = scalar_lea.vmem [#allocation12], 128
    %v1350 = vld [vmem:[%s1349] sm:$0xff]
    %v1351 = vld [vmem:[%s1349 + $0x8] sm:$0xff]
    %v1352 = vld [vmem:[%s1349 + $0x10] sm:$0xff]
    %v1353 = vld [vmem:[%s1349 + $0x18] sm:$0xff]
    %v1354 = vld [vmem:[%s1349 + $0x20] sm:$0xff]
    %v1355 = vld [vmem:[%s1349 + $0x28] sm:$0xff]
    %v1356 = vld [vmem:[%s1349 + $0x30] sm:$0xff]
    %v1357 = vld [vmem:[%s1349 + $0x38] sm:$0xff]
    %v1358 = vld [vmem:[%s1349 + $0x40] sm:$0xff]
    %v1359 = vld [vmem:[%s1349 + $0x48] sm:$0xff]
    %v1360 = vld [vmem:[%s1349 + $0x50] sm:$0xff]
    %v1361 = vld [vmem:[%s1349 + $0x58] sm:$0xff]
    %v1362 = vld [vmem:[%s1349 + $0x60] sm:$0xff]
    %v1363 = vld [vmem:[%s1349 + $0x68] sm:$0xff]
    %v1364 = vld [vmem:[%s1349 + $0x70] sm:$0xff]
    %v1365 = vld [vmem:[%s1349 + $0x78] sm:$0xff]
    %1366 = vmatprep.subr.mxu0 0.0
    %1367 = vmatpush1.msra.mxu0 %v1350
    %1368 = vmatprep.subr.mxu0 0.0
    %1369 = vmatpush1.msra.mxu0 %v1351
    %1370 = vmatprep.subr.mxu0 0.0
    %1371 = vmatpush1.msra.mxu0 %v1352
    %1372 = vmatprep.subr.mxu0 0.0
    %1373 = vmatpush1.msra.mxu0 %v1353
    %1374 = vmatprep.subr.mxu0 0.0
    %1375 = vmatpush1.msra.mxu0 %v1354
    %1376 = vmatprep.subr.mxu0 0.0
    %1377 = vmatpush1.msra.mxu0 %v1355
    %1378 = vmatprep.subr.mxu0 0.0
    %1379 = vmatpush1.msra.mxu0 %v1356
    %1380 = vmatprep.subr.mxu0 0.0
    %1381 = vmatpush1.msra.mxu0 %v1357
    %1382 = vmatprep.subr.mxu0 0.0
    %1383 = vmatpush1.msra.mxu0 %v1358
    %1384 = vmatprep.subr.mxu0 0.0
    %1385 = vmatpush1.msra.mxu0 %v1359
    %1386 = vmatprep.subr.mxu0 0.0
    %1387 = vmatpush1.msra.mxu0 %v1360
    %1388 = vmatprep.subr.mxu0 0.0
    %1389 = vmatpush1.msra.mxu0 %v1361
    %1390 = vmatprep.subr.mxu0 0.0
    %1391 = vmatpush1.msra.mxu0 %v1362
    %1392 = vmatprep.subr.mxu0 0.0
    %1393 = vmatpush1.msra.mxu0 %v1363
    %1394 = vmatprep.subr.mxu0 0.0
    %1395 = vmatpush1.msra.mxu0 %v1364
    %1396 = vmatprep.subr.mxu0 0.0
    %1397 = vmatpush1.msra.mxu0 %v1365
    %1398 = vmatprep.subr.mxu0 0.0
    %1399 = vmatpush1.msra.mxu0 0.0
    %1400 = vmatprep.subr.mxu0 0.0
    %1401 = vmatpush1.msra.mxu0 0.0
    %1402 = vmatprep.subr.mxu0 0.0
    %1403 = vmatpush1.msra.mxu0 0.0
    %1404 = vmatprep.subr.mxu0 0.0
    %1405 = vmatpush1.msra.mxu0 0.0
    %1406 = vmatprep.subr.mxu0 0.0
    %1407 = vmatpush1.msra.mxu0 0.0
    %1408 = vmatprep.subr.mxu0 0.0
    %1409 = vmatpush1.msra.mxu0 0.0
    %1410 = vmatprep.subr.mxu0 0.0
    %1411 = vmatpush1.msra.mxu0 0.0
    %1412 = vmatprep.subr.mxu0 0.0
    %1413 = vmatpush1.msra.mxu0 0.0
    %1414 = vmatprep.subr.mxu0 0.0
    %1415 = vmatpush1.msra.mxu0 0.0
    %1416 = vmatprep.subr.mxu0 0.0
    %1417 = vmatpush1.msra.mxu0 0.0
    %1418 = vmatprep.subr.mxu0 0.0
    %1419 = vmatpush1.msra.mxu0 0.0
    %1420 = vmatprep.subr.mxu0 0.0
    %1421 = vmatpush1.msra.mxu0 0.0
    %1422 = vmatprep.subr.mxu0 0.0
    %1423 = vmatpush1.msra.mxu0 0.0
    %1424 = vmatprep.subr.mxu0 0.0
    %1425 = vmatpush1.msra.mxu0 0.0
    %1426 = vmatprep.subr.mxu0 0.0
    %1427 = vmatpush1.msra.mxu0 0.0
    %1428 = vmatprep.subr.mxu0 0.0
    %1429 = vmatpush1.msra.mxu0 0.0
    %1430 = vmatprep.mubr.f32.mxu0 0.0
    %1431 = vmatmul.mubr.f32.gmra.mrb[0].mxu0 %v1345
    %v1432 = vpop.f32.mrb[0].mxu0
    %v1433 = vadd.f32 0.0, %v1432
    %v1434 = vpop.f32.mrb[0].mxu0
    %1435 = vmatprep.mubr.f32.mxu0 0.0
    %1436 = vmatmul.mubr.f32.gmra.mrb[0].mxu0 %v1346
    %v1437 = vpop.f32.mrb[0].mxu0
    %v1438 = vadd.f32 0.0, %v1437
    %v1439 = vpop.f32.mrb[0].mxu0
    %1440 = vmatprep.mubr.f32.mxu0 0.0
    %1441 = vmatmul.mubr.f32.gmra.mrb[0].mxu0 %v1347
    %v1442 = vpop.f32.mrb[0].mxu0
    %v1443 = vadd.f32 0.0, %v1442
    %v1444 = vpop.f32.mrb[0].mxu0
    %1445 = vmatprep.mubr.f32.mxu0 0.0
    %1446 = vmatmul.mubr.f32.gmra.mrb[0].mxu0 %v1348
    %v1447 = vpop.f32.mrb[0].mxu0
    %v1448 = vadd.f32 0.0, %v1447
    %v1449 = vpop.f32.mrb[0].mxu0
    %1450 = vdwg.mxu0
    %1451 = vmatprep.subr.mxu0 0.0
    %1452 = vmatpush1.msra.mxu0 %v1329
    %1453 = vmatprep.subr.mxu0 0.0
    %1454 = vmatpush1.msra.mxu0 %v1330
    %1455 = vmatprep.subr.mxu0 0.0
    %1456 = vmatpush1.msra.mxu0 %v1331
    %1457 = vmatprep.subr.mxu0 0.0
    %1458 = vmatpush1.msra.mxu0 %v1332
    %1459 = vmatprep.subr.mxu0 0.0
    %1460 = vmatpush1.msra.mxu0 %v1333
    %1461 = vmatprep.subr.mxu0 0.0
    %1462 = vmatpush1.msra.mxu0 %v1334
    %1463 = vmatprep.subr.mxu0 0.0
    %1464 = vmatpush1.msra.mxu0 %v1335
    %1465 = vmatprep.subr.mxu0 0.0
    %1466 = vmatpush1.msra.mxu0 %v1336
    %1467 = vmatprep.subr.mxu0 0.0
    %1468 = vmatpush1.msra.mxu0 %v1337
    %1469 = vmatprep.subr.mxu0 0.0
    %1470 = vmatpush1.msra.mxu0 %v1338
    %1471 = vmatprep.subr.mxu0 0.0
    %1472 = vmatpush1.msra.mxu0 %v1339
    %1473 = vmatprep.subr.mxu0 0.0
    %1474 = vmatpush1.msra.mxu0 %v1340
    %1475 = vmatprep.subr.mxu0 0.0
    %1476 = vmatpush1.msra.mxu0 %v1341
    %1477 = vmatprep.subr.mxu0 0.0
    %1478 = vmatpush1.msra.mxu0 %v1342
    %1479 = vmatprep.subr.mxu0 0.0
    %1480 = vmatpush1.msra.mxu0 %v1343
    %1481 = vmatprep.subr.mxu0 0.0
    %1482 = vmatpush1.msra.mxu0 %v1344
    %1483 = vmatprep.subr.mxu0 0.0
    %1484 = vmatpush1.msra.mxu0 0.0
    %1485 = vmatprep.subr.mxu0 0.0
    %1486 = vmatpush1.msra.mxu0 0.0
    %1487 = vmatprep.subr.mxu0 0.0
    %1488 = vmatpush1.msra.mxu0 0.0
    %1489 = vmatprep.subr.mxu0 0.0
    %1490 = vmatpush1.msra.mxu0 0.0
    %1491 = vmatprep.subr.mxu0 0.0
    %1492 = vmatpush1.msra.mxu0 0.0
    %1493 = vmatprep.subr.mxu0 0.0
    %1494 = vmatpush1.msra.mxu0 0.0
    %1495 = vmatprep.subr.mxu0 0.0
    %1496 = vmatpush1.msra.mxu0 0.0
    %1497 = vmatprep.subr.mxu0 0.0
    %1498 = vmatpush1.msra.mxu0 0.0
    %1499 = vmatprep.subr.mxu0 0.0
    %1500 = vmatpush1.msra.mxu0 0.0
    %1501 = vmatprep.subr.mxu0 0.0
    %1502 = vmatpush1.msra.mxu0 0.0
    %1503 = vmatprep.subr.mxu0 0.0
    %1504 = vmatpush1.msra.mxu0 0.0
    %1505 = vmatprep.subr.mxu0 0.0
    %1506 = vmatpush1.msra.mxu0 0.0
    %1507 = vmatprep.subr.mxu0 0.0
    %1508 = vmatpush1.msra.mxu0 0.0
    %1509 = vmatprep.subr.mxu0 0.0
    %1510 = vmatpush1.msra.mxu0 0.0
    %1511 = vmatprep.subr.mxu0 0.0
    %1512 = vmatpush1.msra.mxu0 0.0
    %1513 = vmatprep.subr.mxu0 0.0
    %1514 = vmatpush1.msra.mxu0 0.0
    %1515 = vmatprep.mubr.f32.mxu0 0.0
    %1516 = vmatmul.mubr.f32.gmra.mrb[0].mxu0 %v1325
    %v1517 = vpop.f32.mrb[0].mxu0
    %v1518 = vadd.f32 %v1433, %v1517
    %v1519 = vpop.f32.mrb[0].mxu0
    %1520 = vmatprep.mubr.f32.mxu0 0.0
    %1521 = vmatmul.mubr.f32.gmra.mrb[0].mxu0 %v1326
    %v1522 = vpop.f32.mrb[0].mxu0
    %v1523 = vadd.f32 %v1438, %v1522
    %v1524 = vpop.f32.mrb[0].mxu0
    %1525 = vmatprep.mubr.f32.mxu0 0.0
    %1526 = vmatmul.mubr.f32.gmra.mrb[0].mxu0 %v1327
    %v1527 = vpop.f32.mrb[0].mxu0
    %v1528 = vadd.f32 %v1443, %v1527
    %v1529 = vpop.f32.mrb[0].mxu0
    %1530 = vmatprep.mubr.f32.mxu0 0.0
    %1531 = vmatmul.mubr.f32.gmra.mrb[0].mxu0 %v1328
    %v1532 = vpop.f32.mrb[0].mxu0
    %v1533 = vadd.f32 %v1448, %v1532
    %v1534 = vpop.f32.mrb[0].mxu0
    %1535 = vdwg.mxu0
    %v1536 = vld [vmem:[#allocation2 + $0x8] sm:$0xff]
    %v1537 = vld [vmem:[#allocation2 + $0x10] sm:$0xff]
    %v1538 = vld [vmem:[#allocation2 + $0x20] sm:$0xff]
    %v1539 = vld [vmem:[#allocation2 + $0x28] sm:$0xff]
    %s1540 = scalar_lea.vmem [#allocation12], 256
    %v1541 = vld [vmem:[%s1540] sm:$0xff]
    %v1542 = vld [vmem:[%s1540 + $0x8] sm:$0xff]
    %v1543 = vld [vmem:[%s1540 + $0x10] sm:$0xff]
    %v1544 = vld [vmem:[%s1540 + $0x18] sm:$0xff]
    %v1545 = vld [vmem:[%s1540 + $0x20] sm:$0xff]
    %v1546 = vld [vmem:[%s1540 + $0x28] sm:$0xff]
    %v1547 = vld [vmem:[%s1540 + $0x30] sm:$0xff]
    %v1548 = vld [vmem:[%s1540 + $0x38] sm:$0xff]
    %v1549 = vld [vmem:[%s1540 + $0x40] sm:$0xff]
    %v1550 = vld [vmem:[%s1540 + $0x48] sm:$0xff]
    %v1551 = vld [vmem:[%s1540 + $0x50] sm:$0xff]
    %v1552 = vld [vmem:[%s1540 + $0x58] sm:$0xff]
    %v1553 = vld [vmem:[%s1540 + $0x60] sm:$0xff]
    %v1554 = vld [vmem:[%s1540 + $0x68] sm:$0xff]
    %v1555 = vld [vmem:[%s1540 + $0x70] sm:$0xff]
    %v1556 = vld [vmem:[%s1540 + $0x78] sm:$0xff]
    %1557 = vmatprep.subr.mxu0 0.0
    %1558 = vmatpush1.msra.mxu0 %v1541
    %1559 = vmatprep.subr.mxu0 0.0
    %1560 = vmatpush1.msra.mxu0 %v1542
    %1561 = vmatprep.subr.mxu0 0.0
    %1562 = vmatpush1.msra.mxu0 %v1543
    %1563 = vmatprep.subr.mxu0 0.0
    %1564 = vmatpush1.msra.mxu0 %v1544
    %1565 = vmatprep.subr.mxu0 0.0
    %1566 = vmatpush1.msra.mxu0 %v1545
    %1567 = vmatprep.subr.mxu0 0.0
    %1568 = vmatpush1.msra.mxu0 %v1546
    %1569 = vmatprep.subr.mxu0 0.0
    %1570 = vmatpush1.msra.mxu0 %v1547
    %1571 = vmatprep.subr.mxu0 0.0
    %1572 = vmatpush1.msra.mxu0 %v1548
    %1573 = vmatprep.subr.mxu0 0.0
    %1574 = vmatpush1.msra.mxu0 %v1549
    %1575 = vmatprep.subr.mxu0 0.0
    %1576 = vmatpush1.msra.mxu0 %v1550
    %1577 = vmatprep.subr.mxu0 0.0
    %1578 = vmatpush1.msra.mxu0 %v1551
    %1579 = vmatprep.subr.mxu0 0.0
    %1580 = vmatpush1.msra.mxu0 %v1552
    %1581 = vmatprep.subr.mxu0 0.0
    %1582 = vmatpush1.msra.mxu0 %v1553
    %1583 = vmatprep.subr.mxu0 0.0
    %1584 = vmatpush1.msra.mxu0 %v1554
    %1585 = vmatprep.subr.mxu0 0.0
    %1586 = vmatpush1.msra.mxu0 %v1555
    %1587 = vmatprep.subr.mxu0 0.0
    %1588 = vmatpush1.msra.mxu0 %v1556
    %1589 = vmatprep.subr.mxu0 0.0
    %1590 = vmatpush1.msra.mxu0 0.0
    %1591 = vmatprep.subr.mxu0 0.0
    %1592 = vmatpush1.msra.mxu0 0.0
    %1593 = vmatprep.subr.mxu0 0.0
    %1594 = vmatpush1.msra.mxu0 0.0
    %1595 = vmatprep.subr.mxu0 0.0
    %1596 = vmatpush1.msra.mxu0 0.0
    %1597 = vmatprep.subr.mxu0 0.0
    %1598 = vmatpush1.msra.mxu0 0.0
    %1599 = vmatprep.subr.mxu0 0.0
    %1600 = vmatpush1.msra.mxu0 0.0
    %1601 = vmatprep.subr.mxu0 0.0
    %1602 = vmatpush1.msra.mxu0 0.0
    %1603 = vmatprep.subr.mxu0 0.0
    %1604 = vmatpush1.msra.mxu0 0.0
    %1605 = vmatprep.subr.mxu0 0.0
    %1606 = vmatpush1.msra.mxu0 0.0
    %1607 = vmatprep.subr.mxu0 0.0
    %1608 = vmatpush1.msra.mxu0 0.0
    %1609 = vmatprep.subr.mxu0 0.0
    %1610 = vmatpush1.msra.mxu0 0.0
    %1611 = vmatprep.subr.mxu0 0.0
    %1612 = vmatpush1.msra.mxu0 0.0
    %1613 = vmatprep.subr.mxu0 0.0
    %1614 = vmatpush1.msra.mxu0 0.0
    %1615 = vmatprep.subr.mxu0 0.0
    %1616 = vmatpush1.msra.mxu0 0.0
    %1617 = vmatprep.subr.mxu0 0.0
    %1618 = vmatpush1.msra.mxu0 0.0
    %1619 = vmatprep.subr.mxu0 0.0
    %1620 = vmatpush1.msra.mxu0 0.0
    %1621 = vmatprep.mubr.f32.mxu0 0.0
    %1622 = vmatmul.mubr.f32.gmra.mrb[0].mxu0 %v1536
    %v1623 = vpop.f32.mrb[0].mxu0
    %v1624 = vadd.f32 0.0, %v1623
    %v1625 = vpop.f32.mrb[0].mxu0
    %1626 = vmatprep.mubr.f32.mxu0 0.0
    %1627 = vmatmul.mubr.f32.gmra.mrb[0].mxu0 %v1537
    %v1628 = vpop.f32.mrb[0].mxu0
    %v1629 = vadd.f32 0.0, %v1628
    %v1630 = vpop.f32.mrb[0].mxu0
    %1631 = vmatprep.mubr.f32.mxu0 0.0
    %1632 = vmatmul.mubr.f32.gmra.mrb[0].mxu0 %v1538
    %v1633 = vpop.f32.mrb[0].mxu0
    %v1634 = vadd.f32 0.0, %v1633
    %v1635 = vpop.f32.mrb[0].mxu0
    %1636 = vmatprep.mubr.f32.mxu0 0.0
    %1637 = vmatmul.mubr.f32.gmra.mrb[0].mxu0 %v1539
    %v1638 = vpop.f32.mrb[0].mxu0
    %v1639 = vadd.f32 0.0, %v1638
    %v1640 = vpop.f32.mrb[0].mxu0
    %1641 = vdwg.mxu0
    %v1642 = vadd.f32 %v1518, %v1624
    %v1643 = vadd.f32 %v1523, %v1629
    %v1644 = vadd.f32 %v1528, %v1634
    %v1645 = vadd.f32 %v1533, %v1639
    %v1646 = vld [vmem:[%s10] sm:$0x1]
    %v1648 = vlaneseq
    %v1649 = vshrl.u32 %v1648, 7
    %v1650 = vsub.s32 0, %v1649
    %v1651 = vrot.slane %v1646, %v1650
    %v1653 = vadd.f32 %v1642, %v1651
    %v1654 = vadd.f32 %v1643, %v1651
    %v1655 = vadd.f32 %v1644, %v1651
    %v1656 = vadd.f32 %v1645, %v1651
    %v1657 = vmax.f32 %v1653, 0.0
    %v1658 = vmax.f32 %v1654, 0.0
    %v1659 = vmax.f32 %v1655, 0.0
    %v1660 = vmax.f32 %v1656, 0.0
    %v1661 = vadd.f32 %v1657, %v977
    %v1662 = vadd.f32 %v1658, %v978
    %v1663 = vadd.f32 %v1659, %v979
    %v1664 = vadd.f32 %v1660, %v980
    %v1665 = vmax.f32 %v1661, 0.0
    %v1666 = vmax.f32 %v1662, 0.0
    %v1667 = vmax.f32 %v1663, 0.0
    %v1668 = vmax.f32 %v1664, 0.0
    %v1669 = vadd.f32 %v1665, %v1666
    %v1670 = vrot.slane %v1669, 4
    %v1671 = vadd.f32 %v1669, %v1670
    %v1672 = vrot.slane %v1671, 2
    %v1673 = vadd.f32 %v1671, %v1672
    %v1674 = vrot.slane %v1673, 1
    %v1675 = vadd.f32 %v1673, %v1674
    %v1676 = vadd.f32 %v1667, %v1668
    %v1677 = vrot.slane %v1676, 4
    %v1678 = vadd.f32 %v1676, %v1677
    %v1679 = vrot.slane %v1678, 2
    %v1680 = vadd.f32 %v1678, %v1679
    %v1681 = vrot.slane %v1680, 1
    %v1682 = vadd.f32 %v1680, %v1681
    %v1683 = vmul.f32 %v1675, 0.0625
    %v1684 = vmul.f32 %v1682, 0.0625
    %v1685 = vld [vmem:[#allocation14] sm:$0xff]
    %v1686 = vld [vmem:[#allocation14 + $0x8] sm:$0xff]
    %v1687 = vld [vmem:[#allocation14 + $0x10] sm:$0xff]
    %v1688 = vld [vmem:[#allocation14 + $0x18] sm:$0xff]
    %v1689 = vld [vmem:[#allocation14 + $0x20] sm:$0xff]
    %v1690 = vld [vmem:[#allocation14 + $0x28] sm:$0xff]
    %v1691 = vld [vmem:[#allocation14 + $0x30] sm:$0xff]
    %v1692 = vld [vmem:[#allocation14 + $0x38] sm:$0xff]
    %v1693 = vld [vmem:[#allocation14 + $0x40] sm:$0xff]
    %v1694 = vld [vmem:[#allocation14 + $0x48] sm:$0xff]
    %v1695 = vld [vmem:[#allocation14 + $0x50] sm:$0xff]
    %v1696 = vld [vmem:[#allocation14 + $0x58] sm:$0xff]
    %v1697 = vld [vmem:[#allocation14 + $0x60] sm:$0xff]
    %v1698 = vld [vmem:[#allocation14 + $0x68] sm:$0xff]
    %v1699 = vld [vmem:[#allocation14 + $0x70] sm:$0xff]
    %v1700 = vld [vmem:[#allocation14 + $0x78] sm:$0xff]
    %v1701 = vld [vmem:[%s12] sm:$0x1]
    %v1703 = vlaneseq
    %v1704 = vshrl.u32 %v1703, 7
    %v1705 = vsub.s32 0, %v1704
    %v1706 = vrot.slane %v1701, %v1705
    %vm1710 = vcmask 1041409
    %v1711 = vsel %vm1710, %v1684, %v1683
    %1713 = vmatprep.subr.mxu0 0.0
    %1714 = vmatpush1.msra.mxu0 %v1685
    %1715 = vmatprep.subr.mxu0 0.0
    %1716 = vmatpush1.msra.mxu0 %v1686
    %1717 = vmatprep.subr.mxu0 0.0
    %1718 = vmatpush1.msra.mxu0 %v1687
    %1719 = vmatprep.subr.mxu0 0.0
    %1720 = vmatpush1.msra.mxu0 %v1688
    %1721 = vmatprep.subr.mxu0 0.0
    %1722 = vmatpush1.msra.mxu0 %v1689
    %1723 = vmatprep.subr.mxu0 0.0
    %1724 = vmatpush1.msra.mxu0 %v1690
    %1725 = vmatprep.subr.mxu0 0.0
    %1726 = vmatpush1.msra.mxu0 %v1691
    %1727 = vmatprep.subr.mxu0 0.0
    %1728 = vmatpush1.msra.mxu0 %v1692
    %1729 = vmatprep.subr.mxu0 0.0
    %1730 = vmatpush1.msra.mxu0 %v1693
    %1731 = vmatprep.subr.mxu0 0.0
    %1732 = vmatpush1.msra.mxu0 %v1694
    %1733 = vmatprep.subr.mxu0 0.0
    %1734 = vmatpush1.msra.mxu0 %v1695
    %1735 = vmatprep.subr.mxu0 0.0
    %1736 = vmatpush1.msra.mxu0 %v1696
    %1737 = vmatprep.subr.mxu0 0.0
    %1738 = vmatpush1.msra.mxu0 %v1697
    %1739 = vmatprep.subr.mxu0 0.0
    %1740 = vmatpush1.msra.mxu0 %v1698
    %1741 = vmatprep.subr.mxu0 0.0
    %1742 = vmatpush1.msra.mxu0 %v1699
    %1743 = vmatprep.subr.mxu0 0.0
    %1744 = vmatpush1.msra.mxu0 %v1700
    %1745 = vmatprep.subr.mxu0 0.0
    %1746 = vmatpush1.msra.mxu0 0.0
    %1747 = vmatprep.subr.mxu0 0.0
    %1748 = vmatpush1.msra.mxu0 0.0
    %1749 = vmatprep.subr.mxu0 0.0
    %1750 = vmatpush1.msra.mxu0 0.0
    %1751 = vmatprep.subr.mxu0 0.0
    %1752 = vmatpush1.msra.mxu0 0.0
    %1753 = vmatprep.subr.mxu0 0.0
    %1754 = vmatpush1.msra.mxu0 0.0
    %1755 = vmatprep.subr.mxu0 0.0
    %1756 = vmatpush1.msra.mxu0 0.0
    %1757 = vmatprep.subr.mxu0 0.0
    %1758 = vmatpush1.msra.mxu0 0.0
    %1759 = vmatprep.subr.mxu0 0.0
    %1760 = vmatpush1.msra.mxu0 0.0
    %1761 = vmatprep.subr.mxu0 0.0
    %1762 = vmatpush1.msra.mxu0 0.0
    %1763 = vmatprep.subr.mxu0 0.0
    %1764 = vmatpush1.msra.mxu0 0.0
    %1765 = vmatprep.subr.mxu0 0.0
    %1766 = vmatpush1.msra.mxu0 0.0
    %1767 = vmatprep.subr.mxu0 0.0
    %1768 = vmatpush1.msra.mxu0 0.0
    %1769 = vmatprep.subr.mxu0 0.0
    %1770 = vmatpush1.msra.mxu0 0.0
    %1771 = vmatprep.subr.mxu0 0.0
    %1772 = vmatpush1.msra.mxu0 0.0
    %1773 = vmatprep.subr.mxu0 0.0
    %1774 = vmatpush1.msra.mxu0 0.0
    %1775 = vmatprep.subr.mxu0 0.0
    %1776 = vmatpush1.msra.mxu0 0.0
    %1777 = vmatprep.mubr.f32.mxu0 0.0
    %1778 = vmatmul.mubr.f32.gmra.mrb[0].mxu0 %v1711
    %v1779 = vpop.f32.mrb[0].mxu0
    %v1780 = vadd.f32 %v1706, %v1779
    %v1781 = vpop.f32.mrb[0].mxu0
    %1782 = vdwg.mxu0
    %vm1783 = vcmp.ge.f32.partialorder %v1780, 0.0
    %v1784 = vmul.f32 %v1780, 0.01
    %v1785 = vsel %vm1783, %v1780, %v1784
    %v1786 = vld [vmem:[#allocation15] sm:$0xff]
    %v1787 = vld [vmem:[#allocation15 + $0x8] sm:$0xff]
    %v1788 = vld [vmem:[#allocation15 + $0x10] sm:$0xff]
    %v1789 = vld [vmem:[#allocation15 + $0x18] sm:$0xff]
    %v1790 = vld [vmem:[#allocation15 + $0x20] sm:$0xff]
    %v1791 = vld [vmem:[#allocation15 + $0x28] sm:$0xff]
    %v1792 = vld [vmem:[#allocation15 + $0x30] sm:$0xff]
    %v1793 = vld [vmem:[#allocation15 + $0x38] sm:$0xff]
    %v1794 = vld [vmem:[#allocation15 + $0x40] sm:$0xff]
    %v1795 = vld [vmem:[#allocation15 + $0x48] sm:$0xff]
    %v1796 = vld [vmem:[#allocation15 + $0x50] sm:$0xff]
    %v1797 = vld [vmem:[#allocation15 + $0x58] sm:$0xff]
    %v1798 = vld [vmem:[#allocation15 + $0x60] sm:$0xff]
    %v1799 = vld [vmem:[#allocation15 + $0x68] sm:$0xff]
    %v1800 = vld [vmem:[#allocation15 + $0x70] sm:$0xff]
    %v1801 = vld [vmem:[#allocation15 + $0x78] sm:$0xff]
    %v1802 = vld [vmem:[%s14] sm:$0x1]
    %v1804 = vlaneseq
    %v1805 = vshrl.u32 %v1804, 7
    %v1806 = vsub.s32 0, %v1805
    %v1807 = vrot.slane %v1802, %v1806
    %1809 = vmatprep.subr.mxu0 0.0
    %1810 = vmatpush1.msra.mxu0 %v1786
    %1811 = vmatprep.subr.mxu0 0.0
    %1812 = vmatpush1.msra.mxu0 %v1787
    %1813 = vmatprep.subr.mxu0 0.0
    %1814 = vmatpush1.msra.mxu0 %v1788
    %1815 = vmatprep.subr.mxu0 0.0
    %1816 = vmatpush1.msra.mxu0 %v1789
    %1817 = vmatprep.subr.mxu0 0.0
    %1818 = vmatpush1.msra.mxu0 %v1790
    %1819 = vmatprep.subr.mxu0 0.0
    %1820 = vmatpush1.msra.mxu0 %v1791
    %1821 = vmatprep.subr.mxu0 0.0
    %1822 = vmatpush1.msra.mxu0 %v1792
    %1823 = vmatprep.subr.mxu0 0.0
    %1824 = vmatpush1.msra.mxu0 %v1793
    %1825 = vmatprep.subr.mxu0 0.0
    %1826 = vmatpush1.msra.mxu0 %v1794
    %1827 = vmatprep.subr.mxu0 0.0
    %1828 = vmatpush1.msra.mxu0 %v1795
    %1829 = vmatprep.subr.mxu0 0.0
    %1830 = vmatpush1.msra.mxu0 %v1796
    %1831 = vmatprep.subr.mxu0 0.0
    %1832 = vmatpush1.msra.mxu0 %v1797
    %1833 = vmatprep.subr.mxu0 0.0
    %1834 = vmatpush1.msra.mxu0 %v1798
    %1835 = vmatprep.subr.mxu0 0.0
    %1836 = vmatpush1.msra.mxu0 %v1799
    %1837 = vmatprep.subr.mxu0 0.0
    %1838 = vmatpush1.msra.mxu0 %v1800
    %1839 = vmatprep.subr.mxu0 0.0
    %1840 = vmatpush1.msra.mxu0 %v1801
    %1841 = vmatprep.subr.mxu0 0.0
    %1842 = vmatpush1.msra.mxu0 0.0
    %1843 = vmatprep.subr.mxu0 0.0
    %1844 = vmatpush1.msra.mxu0 0.0
    %1845 = vmatprep.subr.mxu0 0.0
    %1846 = vmatpush1.msra.mxu0 0.0
    %1847 = vmatprep.subr.mxu0 0.0
    %1848 = vmatpush1.msra.mxu0 0.0
    %1849 = vmatprep.subr.mxu0 0.0
    %1850 = vmatpush1.msra.mxu0 0.0
    %1851 = vmatprep.subr.mxu0 0.0
    %1852 = vmatpush1.msra.mxu0 0.0
    %1853 = vmatprep.subr.mxu0 0.0
    %1854 = vmatpush1.msra.mxu0 0.0
    %1855 = vmatprep.subr.mxu0 0.0
    %1856 = vmatpush1.msra.mxu0 0.0
    %1857 = vmatprep.subr.mxu0 0.0
    %1858 = vmatpush1.msra.mxu0 0.0
    %1859 = vmatprep.subr.mxu0 0.0
    %1860 = vmatpush1.msra.mxu0 0.0
    %1861 = vmatprep.subr.mxu0 0.0
    %1862 = vmatpush1.msra.mxu0 0.0
    %1863 = vmatprep.subr.mxu0 0.0
    %1864 = vmatpush1.msra.mxu0 0.0
    %1865 = vmatprep.subr.mxu0 0.0
    %1866 = vmatpush1.msra.mxu0 0.0
    %1867 = vmatprep.subr.mxu0 0.0
    %1868 = vmatpush1.msra.mxu0 0.0
    %1869 = vmatprep.subr.mxu0 0.0
    %1870 = vmatpush1.msra.mxu0 0.0
    %1871 = vmatprep.subr.mxu0 0.0
    %1872 = vmatpush1.msra.mxu0 0.0
    %1873 = vmatprep.mubr.f32.mxu0 0.0
    %1874 = vmatmul.mubr.f32.gmra.mrb[0].mxu0 %v1785
    %v1875 = vpop.f32.mrb[0].mxu0
    %v1876 = vadd.f32 %v1807, %v1875
    %v1877 = vpop.f32.mrb[0].mxu0
    %1878 = vdwg.mxu0
    %vm1879 = vcmp.ge.f32.partialorder %v1876, 0.0
    %v1880 = vmul.f32 %v1876, 0.01
    %v1881 = vsel %vm1879, %v1876, %v1880
    %v1882 = vld [vmem:[#allocation17] sm:$0xff]
    %v1883 = vld [vmem:[#allocation17 + $0x8] sm:$0xff]
    %v1884 = vld [vmem:[#allocation17 + $0x10] sm:$0xff]
    %v1885 = vld [vmem:[#allocation17 + $0x18] sm:$0xff]
    %v1886 = vld [vmem:[#allocation17 + $0x20] sm:$0xff]
    %v1887 = vld [vmem:[#allocation17 + $0x28] sm:$0xff]
    %v1888 = vld [vmem:[#allocation17 + $0x30] sm:$0xff]
    %v1889 = vld [vmem:[#allocation17 + $0x38] sm:$0xff]
    %v1890 = vld [vmem:[#allocation17 + $0x40] sm:$0xff]
    %v1891 = vld [vmem:[#allocation17 + $0x48] sm:$0xff]
    %v1892 = vld [vmem:[#allocation17 + $0x50] sm:$0xff]
    %v1893 = vld [vmem:[#allocation17 + $0x58] sm:$0xff]
    %v1894 = vld [vmem:[#allocation17 + $0x60] sm:$0xff]
    %v1895 = vld [vmem:[#allocation17 + $0x68] sm:$0xff]
    %v1896 = vld [vmem:[#allocation17 + $0x70] sm:$0xff]
    %v1897 = vld [vmem:[#allocation17 + $0x78] sm:$0xff]
    %v1898 = vld [vmem:[%s16] sm:$0x1]
    %v1900 = vlaneseq
    %v1901 = vshrl.u32 %v1900, 7
    %v1902 = vsub.s32 0, %v1901
    %v1903 = vrot.slane %v1898, %v1902
    %1905 = vmatprep.subr.mxu0 0.0
    %1906 = vmatpush1.msra.mxu0 %v1882
    %1907 = vmatprep.subr.mxu0 0.0
    %1908 = vmatpush1.msra.mxu0 %v1883
    %1909 = vmatprep.subr.mxu0 0.0
    %1910 = vmatpush1.msra.mxu0 %v1884
    %1911 = vmatprep.subr.mxu0 0.0
    %1912 = vmatpush1.msra.mxu0 %v1885
    %1913 = vmatprep.subr.mxu0 0.0
    %1914 = vmatpush1.msra.mxu0 %v1886
    %1915 = vmatprep.subr.mxu0 0.0
    %1916 = vmatpush1.msra.mxu0 %v1887
    %1917 = vmatprep.subr.mxu0 0.0
    %1918 = vmatpush1.msra.mxu0 %v1888
    %1919 = vmatprep.subr.mxu0 0.0
    %1920 = vmatpush1.msra.mxu0 %v1889
    %1921 = vmatprep.subr.mxu0 0.0
    %1922 = vmatpush1.msra.mxu0 %v1890
    %1923 = vmatprep.subr.mxu0 0.0
    %1924 = vmatpush1.msra.mxu0 %v1891
    %1925 = vmatprep.subr.mxu0 0.0
    %1926 = vmatpush1.msra.mxu0 %v1892
    %1927 = vmatprep.subr.mxu0 0.0
    %1928 = vmatpush1.msra.mxu0 %v1893
    %1929 = vmatprep.subr.mxu0 0.0
    %1930 = vmatpush1.msra.mxu0 %v1894
    %1931 = vmatprep.subr.mxu0 0.0
    %1932 = vmatpush1.msra.mxu0 %v1895
    %1933 = vmatprep.subr.mxu0 0.0
    %1934 = vmatpush1.msra.mxu0 %v1896
    %1935 = vmatprep.subr.mxu0 0.0
    %1936 = vmatpush1.msra.mxu0 %v1897
    %1937 = vmatprep.subr.mxu0 0.0
    %1938 = vmatpush1.msra.mxu0 0.0
    %1939 = vmatprep.subr.mxu0 0.0
    %1940 = vmatpush1.msra.mxu0 0.0
    %1941 = vmatprep.subr.mxu0 0.0
    %1942 = vmatpush1.msra.mxu0 0.0
    %1943 = vmatprep.subr.mxu0 0.0
    %1944 = vmatpush1.msra.mxu0 0.0
    %1945 = vmatprep.subr.mxu0 0.0
    %1946 = vmatpush1.msra.mxu0 0.0
    %1947 = vmatprep.subr.mxu0 0.0
    %1948 = vmatpush1.msra.mxu0 0.0
    %1949 = vmatprep.subr.mxu0 0.0
    %1950 = vmatpush1.msra.mxu0 0.0
    %1951 = vmatprep.subr.mxu0 0.0
    %1952 = vmatpush1.msra.mxu0 0.0
    %1953 = vmatprep.subr.mxu0 0.0
    %1954 = vmatpush1.msra.mxu0 0.0
    %1955 = vmatprep.subr.mxu0 0.0
    %1956 = vmatpush1.msra.mxu0 0.0
    %1957 = vmatprep.subr.mxu0 0.0
    %1958 = vmatpush1.msra.mxu0 0.0
    %1959 = vmatprep.subr.mxu0 0.0
    %1960 = vmatpush1.msra.mxu0 0.0
    %1961 = vmatprep.subr.mxu0 0.0
    %1962 = vmatpush1.msra.mxu0 0.0
    %1963 = vmatprep.subr.mxu0 0.0
    %1964 = vmatpush1.msra.mxu0 0.0
    %1965 = vmatprep.subr.mxu0 0.0
    %1966 = vmatpush1.msra.mxu0 0.0
    %1967 = vmatprep.subr.mxu0 0.0
    %1968 = vmatpush1.msra.mxu0 0.0
    %1969 = vmatprep.mubr.f32.mxu0 0.0
    %1970 = vmatmul.mubr.f32.gmra.mrb[0].mxu0 %v1881
    %v1971 = vpop.f32.mrb[0].mxu0
    %v1972 = vadd.f32 %v1903, %v1971
    %v1973 = vpop.f32.mrb[0].mxu0
    %1974 = vdwg.mxu0
    %v1977 = vunpack.c.l.s4 1966171168
    %v1978 = vunpack.c.0.s8 %v1977
    %v1979 = vlaneseq
    %v1980 = vshrl.u32 %v1979, 7
    %v1981 = vsub.s32 %v1978, %v1980
    %v1982 = vrot.slane %v1972, %v1981
    %v1983 = vcombine.high %v1982, %v1982
    %v1985 = vunpack.c.l.s4 1966171168
    %v1986 = vunpack.c.0.s8 %v1985
    %v1987 = vlaneseq
    %v1988 = vshrl.u32 %v1987, 7
    %v1989 = vsub.s32 %v1986, %v1988
    %v1990 = vrot.slane %v1982, %v1989
    %v1992 = vunpack.c.l.s4 1966171168
    %v1993 = vunpack.c.0.s8 %v1992
    %v1994 = vlaneseq
    %v1995 = vshrl.u32 %v1994, 7
    %v1996 = vsub.s32 %v1993, %v1995
    %v1997 = vrot.slane %v1983, %v1996
    %2000 = vst [vmem:[#allocation18] sm:$0x1] %v1990
    %2001 = vst [vmem:[#allocation18 + $0x1] sm:$0x1] %v1997
    // Predicated region
    $region106: #{tpu_custom_call.1} parent=1 // pred_check
      _
    $region107: #{tpu_custom_call.1} parent=1 // pred_check_branch
      %2003 = sbr.rel (0) target = $region109
    $region108: #{tpu_custom_call.1} parent=1 // pred_region
      %s2005 = ssub.s32 32, 32
      %2006 = vsyncadd [#allocation5], %s2005
      %s2007 = sshll.u32 [#allocation18], 4
      %s2008 = int_to_ptr.vmem [resolvable:$true] %s2007
      %2013 = dma.vmem_to_hbm [thread:$0]  %s2008, 32, %s17, [#allocation5], 16, 16, 1
    $region109: #{tpu_custom_call.1} parent=1 // pred_fallthru
      _
    // Predicated region
    $region110: #{tpu_custom_call.1} parent=1 // pred_check
      _
    $region111: #{tpu_custom_call.1} parent=1 // pred_check_branch
      %2015 = sbr.rel (0) target = $region113
    $region112: #{tpu_custom_call.1} parent=1 // pred_region
      %2016 = dma.done [#allocation5], 32
    $region113: #{tpu_custom_call.1} parent=1 // pred_fallthru
      _
    %2017 = vsyncpa [#allocation4], 1
    %2018 = vsyncpa [#allocation7], 1
    %2019 = vsyncpa [#allocation10], 1
    %2020 = vsyncpa [#allocation13], 1
    %2021 = vsyncpa [#allocation16], 1
    %2022 = vsyncpa [#allocation5], 1

</llo_original>
